<compile_context>
chip_gen: v7x
topology: tpu7x:2x2x1
jax: 0.10.0
libtpu: 0.0.40
codegen_flags: <defaults>
</compile_context>

<pallas_src>
import jax
import jax.numpy as jnp
from jax import lax
from jax.experimental import pallas as pl
from jax.experimental.pallas import tpu as pltpu

# ---- "args" (mirrors the argparse config of the torch script) -----------------
LABELS = 8          # args.labels
T = 2               # args.T
C_LENGTH = 3        # args.c_length
ONEHOT = True       # args.onehot

SEQ = T + 2 * C_LENGTH      # denoise-task sequence length (= 8)
BATCH = 8
HIDDEN = 128
NB = SEQ * BATCH            # 64 rows total

IN_DIM = LABELS + 2         # one-hot width          (10)
N_CLASSES = LABELS + 1      # linear readout classes (9)
IN_PAD = 128                # lane-padded one-hot width
CLS_PAD = 128               # lane-padded class width
NEG_INF = -1e30


def _forward_kernel(xy_ref, wih_ref, whh_ref, bh_ref, wlin_ref, blin_ref,
                    hiddens_ref, scalars_ref):
    # ---- load x / y once (single (NB, 2) int32 block) --------------------------
    xy = xy_ref[...]                                             # (NB, 2) int32
    xv = xy[:, 0:1]                                              # (NB, 1)
    yv = xy[:, 1:2]                                              # (NB, 1)

    # ---- one-hot(x) for ALL seq*batch rows + hoisted input projection ----------
    in_idx = lax.broadcasted_iota(jnp.int32, (NB, IN_PAD), 1)
    onehot_all = (in_idx == xv).astype(jnp.bfloat16)             # exact 0/1 in bf16
    inp_proj = (jnp.dot(onehot_all, wih_ref[...],
                        preferred_element_type=jnp.float32)
                + bh_ref[...])                                   # (NB, HIDDEN) f32

    # ---- serial tanh-RNN recurrence (statically unrolled, SEQ = 8) -------------
    whh = whh_ref[...]                                           # (H, H) bf16
    # step 0: hidden starts at zero -> h @ Whh == 0, skip the matmul entirely
    h = jnp.tanh(inp_proj[0:BATCH, :])                           # (B, H) f32
    hiddens_ref[pl.ds(0, BATCH), :] = h
    for t in range(1, SEQ):
        pre = inp_proj[t * BATCH:(t + 1) * BATCH, :] + jnp.dot(
            h.astype(jnp.bfloat16), whh, preferred_element_type=jnp.float32)
        h = jnp.tanh(pre)                                        # f32
        hiddens_ref[pl.ds(t * BATCH, BATCH), :] = h

    # ---- batched linear readout + class-padding mask ---------------------------
    h_all = hiddens_ref[...]                                     # (NB, HIDDEN) f32
    logits = (jnp.dot(h_all.astype(jnp.bfloat16), wlin_ref[...],
                      preferred_element_type=jnp.float32)
              + blin_ref[...])                                   # (NB, CLS_PAD) f32
    cls_idx = lax.broadcasted_iota(jnp.int32, (NB, CLS_PAD), 1)
    logits = jnp.where(cls_idx < N_CLASSES, logits, NEG_INF)

    # ---- batched CrossEntropyLoss over every (step, batch) row -----------------
    row_max = jnp.max(logits, axis=-1, keepdims=True)            # (NB, 1)
    lse = row_max + jnp.log(jnp.sum(jnp.exp(logits - row_max),
                                    axis=-1, keepdims=True))     # (NB, 1)
    tgt_logit = jnp.sum(jnp.where(cls_idx == yv, logits, 0.0),
                        axis=-1, keepdims=True)                  # (NB, 1)
    ce = lse - tgt_logit                                         # (NB, 1)

    # tail window: step >= T + C_LENGTH  <=>  row >= (T + C_LENGTH) * BATCH
    row_idx = lax.broadcasted_iota(jnp.int32, (NB, 1), 0)
    tail = (row_idx >= (T + C_LENGTH) * BATCH).astype(jnp.float32)

    # torch.argmax returns the FIRST maximal index.
    is_max = logits == row_max
    pred = jnp.min(jnp.where(is_max, cls_idx, CLS_PAD),
                   axis=-1, keepdims=True)                       # (NB, 1)
    correct = (pred == yv).astype(jnp.float32)

    inv_b = 1.0 / BATCH
    loss_sum = jnp.sum(ce, axis=0, keepdims=True) * inv_b          # (1, 1)
    loss2_sum = jnp.sum(ce * tail, axis=0, keepdims=True) * inv_b  # (1, 1)
    acc_count = jnp.sum(correct * tail, axis=0, keepdims=True)     # (1, 1)

    # ---- pack scalars into one lane-dense (1, 128) store ------------------------
    lane = lax.broadcasted_iota(jnp.int32, (1, CLS_PAD), 1)
    out_vec = jnp.where(lane == 0, loss_sum,
              jnp.where(lane == 1, loss2_sum,
              jnp.where(lane == 2, acc_count, 0.0)))
    scalars_ref[...] = out_vec


@jax.jit
def model_forward(x, y, wih_t, whh_t, bh, wlin_t, blin):
    # merge x / y into one (NB, 2) int32 array -> single block / DMA
    xy = jnp.concatenate(
        [x.reshape(NB, 1), y.reshape(NB, 1)], axis=1).astype(jnp.int32)

    # bf16 MXU operands (weights); biases stay f32 (added post-matmul)
    wih_bf = wih_t.astype(jnp.bfloat16)
    whh_bf = whh_t.astype(jnp.bfloat16)
    wlin_bf = wlin_t.astype(jnp.bfloat16)

    out_shape = (
        jax.ShapeDtypeStruct((NB, HIDDEN), jnp.float32),           # hiddens (flat)
        jax.ShapeDtypeStruct((1, CLS_PAD), jnp.float32),           # packed scalars
    )
    in_specs = [
        pl.BlockSpec((NB, 2), lambda i: (0, 0)),                   # x|y merged
        pl.BlockSpec((IN_PAD, HIDDEN), lambda i: (0, 0)),          # W_ih^T (bf16, padded)
        pl.BlockSpec((HIDDEN, HIDDEN), lambda i: (0, 0)),          # W_hh^T (bf16)
        pl.BlockSpec((1, HIDDEN), lambda i: (0, 0)),               # b_h (f32)
        pl.BlockSpec((HIDDEN, CLS_PAD), lambda i: (0, 0)),         # W_lin^T (bf16, padded)
        pl.BlockSpec((1, CLS_PAD), lambda i: (0, 0)),              # b_lin (f32)
    ]
    out_specs = (
        pl.BlockSpec((NB, HIDDEN), lambda i: (0, 0)),
        pl.BlockSpec((1, CLS_PAD), lambda i: (0, 0)),
    )

    hiddens_flat, scalars = pl.pallas_call(
        _forward_kernel,
        out_shape=out_shape,
        grid_spec=pltpu.PrefetchScalarGridSpec(
            num_scalar_prefetch=0,
            grid=(1,),                      # single invocation; loop runs in-kernel
            in_specs=in_specs,
            out_specs=out_specs,
        ),
        compiler_params=pltpu.CompilerParams(
            dimension_semantics=("arbitrary",)),
    )(xy, wih_bf, whh_bf, bh, wlin_bf, blin)

    hiddens = hiddens_flat.reshape(SEQ, BATCH, HIDDEN)   # free reshape in XLA
    loss = scalars[0, 0] / SEQ                           # loss /= x.shape[0]
    loss2 = scalars[0, 1] / SEQ                          # loss2 /= x.shape[0]
    accuracy = scalars[0, 2] / (C_LENGTH * BATCH)        # /= c_length * x.shape[1]
    return loss, accuracy, hiddens, loss2


def ref_forward(x, y, wih_t, whh_t, bh, wlin_t, blin):
    """Pure-JAX reference mirroring the kernel's bf16-matmul / f32-accumulate."""
    wih_bf = wih_t[:IN_DIM].astype(jnp.bfloat16)
    whh_bf = whh_t.astype(jnp.bfloat16)
    wlin_bf = wlin_t[:, :N_CLASSES].astype(jnp.bfloat16)
    h = jnp.zeros((BATCH, HIDDEN), jnp.float32)
    loss = 0.0
    loss2 = 0.0
    acc = 0.0
    hiddens = []
    for i in range(SEQ):
        inp = jax.nn.one_hot(x[i, :, 0], IN_DIM, dtype=jnp.bfloat16)
        pre = (jnp.dot(inp, wih_bf, preferred_element_type=jnp.float32)
               + jnp.dot(h.astype(jnp.bfloat16), whh_bf,
                         preferred_element_type=jnp.float32)
               + bh[0])
        h = jnp.tanh(pre)
        hiddens.append(h)
        logits = (jnp.dot(h.astype(jnp.bfloat16), wlin_bf,
                          preferred_element_type=jnp.float32)
                  + blin[0, :N_CLASSES])
        tgt = y[i, :, 0]
        lse = jax.scipy.special.logsumexp(logits, axis=-1)
        ce = jnp.mean(lse - logits[jnp.arange(BATCH), tgt])
        loss += ce
        if i >= T + C_LENGTH:
            loss2 += ce
            preds = jnp.argmax(logits, axis=-1)
            acc += jnp.sum((preds == tgt).astype(jnp.float32))
    return (loss / SEQ, acc / (C_LENGTH * BATCH), loss2 / SEQ,
            jnp.stack(hiddens, axis=0))


def make_params(key):
    k_ih, k_hh, k_lin = jax.random.split(key, 3)
    # RNN cell parameters (uniform a la torch RNNCell default)
    bound = 1.0 / jnp.sqrt(HIDDEN)
    wih = jax.random.uniform(k_ih, (IN_DIM, HIDDEN), jnp.float32, -bound, bound)
    whh = jax.random.uniform(k_hh, (HIDDEN, HIDDEN), jnp.float32, -bound, bound)
    bh = jnp.zeros((1, HIDDEN), jnp.float32)
    # nn.Linear(hidden, labels+1) with xavier_normal_ weight, zero bias
    xavier_std = jnp.sqrt(2.0 / (HIDDEN + N_CLASSES))
    wlin = xavier_std * jax.random.normal(k_lin, (HIDDEN, N_CLASSES), jnp.float32)
    blin = jnp.zeros((1, N_CLASSES), jnp.float32)
    # lane-pad to 128 for the kernel
    wih_p = jnp.zeros((IN_PAD, HIDDEN), jnp.float32).at[:IN_DIM].set(wih)
    wlin_p = jnp.zeros((HIDDEN, CLS_PAD), jnp.float32).at[:, :N_CLASSES].set(wlin)
    blin_p = jnp.zeros((1, CLS_PAD), jnp.float32).at[:, :N_CLASSES].set(blin)
    return wih_p, whh, bh, wlin_p, blin_p


if __name__ == "__main__":
    key = jax.random.PRNGKey(0)
    kx, ky, kp = jax.random.split(key, 3)

    x = jax.random.randint(kx, (SEQ, BATCH, 1), 0, IN_DIM, dtype=jnp.int32)
    y = jax.random.randint(ky, (SEQ, BATCH, 1), 0, N_CLASSES, dtype=jnp.int32)
    params = make_params(kp)

    loss, accuracy, hiddens, loss2 = model_forward(x, y, *params)
    jax.block_until_ready((loss, accuracy, hiddens, loss2))

    # lightweight correctness check against a pure-JAX reference
    r_loss, r_acc, r_loss2, r_hiddens = ref_forward(x, y, *params)
    assert jnp.allclose(loss, r_loss, rtol=1e-2, atol=1e-2), (loss, r_loss)
    assert jnp.allclose(loss2, r_loss2, rtol=1e-2, atol=1e-2), (loss2, r_loss2)
    assert jnp.allclose(accuracy, r_acc, rtol=1e-2, atol=1e-2), (accuracy, r_acc)
    assert hiddens.shape == (SEQ, BATCH, HIDDEN)
    assert jnp.allclose(hiddens, r_hiddens, rtol=1e-2, atol=1e-2)

    print("KERNEL_OK")
</pallas_src>

<mosaic_0001>
module attributes {stable_mosaic.version = 11 : i64} {
  func.func @_forward_kernel(%arg0: i32, %arg1: memref<64x2xi32, #tpu.memory_space<vmem>>, %arg2: memref<128x128xbf16, #tpu.memory_space<vmem>>, %arg3: memref<128x128xbf16, #tpu.memory_space<vmem>>, %arg4: memref<1x128xf32, #tpu.memory_space<vmem>>, %arg5: memref<128x128xbf16, #tpu.memory_space<vmem>>, %arg6: memref<1x128xf32, #tpu.memory_space<vmem>>, %arg7: memref<64x128xf32, #tpu.memory_space<vmem>>, %arg8: memref<1x128xf32, #tpu.memory_space<vmem>>) attributes {dimension_semantics = [#tpu.dimension_semantics<arbitrary>], iteration_bounds = array<i64: 1>, scalar_prefetch = 0 : i64, scratch_operands = 0 : i64, tpu.core_type = #tpu.core_type<tc>, window_params = [{pipeline_mode = #tpu.pipeline_mode<synchronous>, transform_indices = @transform_0, window_bounds = array<i64: 64, 2>}, {pipeline_mode = #tpu.pipeline_mode<synchronous>, transform_indices = @transform_1, window_bounds = array<i64: 128, 128>}, {pipeline_mode = #tpu.pipeline_mode<synchronous>, transform_indices = @transform_2, window_bounds = array<i64: 128, 128>}, {pipeline_mode = #tpu.pipeline_mode<synchronous>, transform_indices = @transform_3, window_bounds = array<i64: 1, 128>}, {pipeline_mode = #tpu.pipeline_mode<synchronous>, transform_indices = @transform_4, window_bounds = array<i64: 128, 128>}, {pipeline_mode = #tpu.pipeline_mode<synchronous>, transform_indices = @transform_5, window_bounds = array<i64: 1, 128>}, {pipeline_mode = #tpu.pipeline_mode<synchronous>, transform_indices = @transform_6, window_bounds = array<i64: 64, 128>}, {pipeline_mode = #tpu.pipeline_mode<synchronous>, transform_indices = @transform_7, window_bounds = array<i64: 1, 128>}]} {
    %c0 = arith.constant 0 : index
    %c0_0 = arith.constant 0 : index
    %0 = vector.load %arg1[%c0, %c0_0] : memref<64x2xi32, #tpu.memory_space<vmem>>, vector<64x2xi32>
    %1 = vector.extract_strided_slice %0 {offsets = [0, 0], sizes = [64, 1], strides = [1, 1]} : vector<64x2xi32> to vector<64x1xi32>
    %2 = vector.extract_strided_slice %0 {offsets = [0, 1], sizes = [64, 1], strides = [1, 1]} : vector<64x2xi32> to vector<64x1xi32>
    %3 = tpu.iota {dimensions = array<i32: 1>} : vector<64x128xi32>
    %4 = vector.broadcast %1 : vector<64x1xi32> to vector<64x128xi32>
    %5 = arith.cmpi eq, %3, %4 : vector<64x128xi32>
    %6 = arith.extui %5 : vector<64x128xi1> to vector<64x128xi32>
    %7 = arith.sitofp %6 : vector<64x128xi32> to vector<64x128xf32>
    %8 = arith.truncf %7 : vector<64x128xf32> to vector<64x128xbf16>
    %c0_1 = arith.constant 0 : index
    %c0_2 = arith.constant 0 : index
    %9 = vector.load %arg2[%c0_1, %c0_2] : memref<128x128xbf16, #tpu.memory_space<vmem>>, vector<128x128xbf16>
    %cst = arith.constant dense<0.000000e+00> : vector<64x128xf32>
    %10 = tpu.matmul %8, %9, %cst {dimension_numbers = #tpu.dot_dimension_numbers<[1], [0], [0], [1], [0, 0, 1, 1], [], []>} : vector<64x128xbf16>, vector<128x128xbf16>, vector<64x128xf32> -> vector<64x128xf32>
    %c0_3 = arith.constant 0 : index
    %c0_4 = arith.constant 0 : index
    %11 = vector.load %arg4[%c0_3, %c0_4] : memref<1x128xf32, #tpu.memory_space<vmem>>, vector<1x128xf32>
    %12 = vector.broadcast %11 : vector<1x128xf32> to vector<64x128xf32>
    %13 = arith.addf %10, %12 : vector<64x128xf32>
    %c0_5 = arith.constant 0 : index
    %c0_6 = arith.constant 0 : index
    %14 = vector.load %arg3[%c0_5, %c0_6] : memref<128x128xbf16, #tpu.memory_space<vmem>>, vector<128x128xbf16>
    %15 = vector.extract_strided_slice %13 {offsets = [0, 0], sizes = [8, 128], strides = [1, 1]} : vector<64x128xf32> to vector<8x128xf32>
    %16 = math.tanh %15 : vector<8x128xf32>
    %c0_7 = arith.constant 0 : index
    %c0_8 = arith.constant 0 : index
    %17 = vector.load %arg7[%c0_7, %c0_8] : memref<64x128xf32, #tpu.memory_space<vmem>>, vector<8x128xf32>
    tpu.vector_store %arg7[%c0_7, %c0_8], %16 {strides = array<i32>} : memref<64x128xf32, #tpu.memory_space<vmem>>, vector<8x128xf32>,
    %18 = vector.extract_strided_slice %13 {offsets = [8, 0], sizes = [8, 128], strides = [1, 1]} : vector<64x128xf32> to vector<8x128xf32>
    %19 = arith.truncf %16 : vector<8x128xf32> to vector<8x128xbf16>
    %cst_9 = arith.constant dense<0.000000e+00> : vector<8x128xf32>
    %20 = tpu.matmul %19, %14, %cst_9 {dimension_numbers = #tpu.dot_dimension_numbers<[1], [0], [0], [1], [0, 0, 1, 1], [], []>} : vector<8x128xbf16>, vector<128x128xbf16>, vector<8x128xf32> -> vector<8x128xf32>
    %21 = arith.addf %18, %20 : vector<8x128xf32>
    %22 = math.tanh %21 : vector<8x128xf32>
    %c8 = arith.constant 8 : index
    %c0_10 = arith.constant 0 : index
    %23 = vector.load %arg7[%c8, %c0_10] : memref<64x128xf32, #tpu.memory_space<vmem>>, vector<8x128xf32>
    tpu.vector_store %arg7[%c8, %c0_10], %22 {strides = array<i32>} : memref<64x128xf32, #tpu.memory_space<vmem>>, vector<8x128xf32>,
    %24 = vector.extract_strided_slice %13 {offsets = [16, 0], sizes = [8, 128], strides = [1, 1]} : vector<64x128xf32> to vector<8x128xf32>
    %25 = arith.truncf %22 : vector<8x128xf32> to vector<8x128xbf16>
    %cst_11 = arith.constant dense<0.000000e+00> : vector<8x128xf32>
    %26 = tpu.matmul %25, %14, %cst_11 {dimension_numbers = #tpu.dot_dimension_numbers<[1], [0], [0], [1], [0, 0, 1, 1], [], []>} : vector<8x128xbf16>, vector<128x128xbf16>, vector<8x128xf32> -> vector<8x128xf32>
    %27 = arith.addf %24, %26 : vector<8x128xf32>
    %28 = math.tanh %27 : vector<8x128xf32>
    %c16 = arith.constant 16 : index
    %c0_12 = arith.constant 0 : index
    %29 = vector.load %arg7[%c16, %c0_12] : memref<64x128xf32, #tpu.memory_space<vmem>>, vector<8x128xf32>
    tpu.vector_store %arg7[%c16, %c0_12], %28 {strides = array<i32>} : memref<64x128xf32, #tpu.memory_space<vmem>>, vector<8x128xf32>,
    %30 = vector.extract_strided_slice %13 {offsets = [24, 0], sizes = [8, 128], strides = [1, 1]} : vector<64x128xf32> to vector<8x128xf32>
    %31 = arith.truncf %28 : vector<8x128xf32> to vector<8x128xbf16>
    %cst_13 = arith.constant dense<0.000000e+00> : vector<8x128xf32>
    %32 = tpu.matmul %31, %14, %cst_13 {dimension_numbers = #tpu.dot_dimension_numbers<[1], [0], [0], [1], [0, 0, 1, 1], [], []>} : vector<8x128xbf16>, vector<128x128xbf16>, vector<8x128xf32> -> vector<8x128xf32>
    %33 = arith.addf %30, %32 : vector<8x128xf32>
    %34 = math.tanh %33 : vector<8x128xf32>
    %c24 = arith.constant 24 : index
    %c0_14 = arith.constant 0 : index
    %35 = vector.load %arg7[%c24, %c0_14] : memref<64x128xf32, #tpu.memory_space<vmem>>, vector<8x128xf32>
    tpu.vector_store %arg7[%c24, %c0_14], %34 {strides = array<i32>} : memref<64x128xf32, #tpu.memory_space<vmem>>, vector<8x128xf32>,
    %36 = vector.extract_strided_slice %13 {offsets = [32, 0], sizes = [8, 128], strides = [1, 1]} : vector<64x128xf32> to vector<8x128xf32>
    %37 = arith.truncf %34 : vector<8x128xf32> to vector<8x128xbf16>
    %cst_15 = arith.constant dense<0.000000e+00> : vector<8x128xf32>
    %38 = tpu.matmul %37, %14, %cst_15 {dimension_numbers = #tpu.dot_dimension_numbers<[1], [0], [0], [1], [0, 0, 1, 1], [], []>} : vector<8x128xbf16>, vector<128x128xbf16>, vector<8x128xf32> -> vector<8x128xf32>
    %39 = arith.addf %36, %38 : vector<8x128xf32>
    %40 = math.tanh %39 : vector<8x128xf32>
    %c32 = arith.constant 32 : index
    %c0_16 = arith.constant 0 : index
    %41 = vector.load %arg7[%c32, %c0_16] : memref<64x128xf32, #tpu.memory_space<vmem>>, vector<8x128xf32>
    tpu.vector_store %arg7[%c32, %c0_16], %40 {strides = array<i32>} : memref<64x128xf32, #tpu.memory_space<vmem>>, vector<8x128xf32>,
    %42 = vector.extract_strided_slice %13 {offsets = [40, 0], sizes = [8, 128], strides = [1, 1]} : vector<64x128xf32> to vector<8x128xf32>
    %43 = arith.truncf %40 : vector<8x128xf32> to vector<8x128xbf16>
    %cst_17 = arith.constant dense<0.000000e+00> : vector<8x128xf32>
    %44 = tpu.matmul %43, %14, %cst_17 {dimension_numbers = #tpu.dot_dimension_numbers<[1], [0], [0], [1], [0, 0, 1, 1], [], []>} : vector<8x128xbf16>, vector<128x128xbf16>, vector<8x128xf32> -> vector<8x128xf32>
    %45 = arith.addf %42, %44 : vector<8x128xf32>
    %46 = math.tanh %45 : vector<8x128xf32>
    %c40 = arith.constant 40 : index
    %c0_18 = arith.constant 0 : index
    %47 = vector.load %arg7[%c40, %c0_18] : memref<64x128xf32, #tpu.memory_space<vmem>>, vector<8x128xf32>
    tpu.vector_store %arg7[%c40, %c0_18], %46 {strides = array<i32>} : memref<64x128xf32, #tpu.memory_space<vmem>>, vector<8x128xf32>,
    %48 = vector.extract_strided_slice %13 {offsets = [48, 0], sizes = [8, 128], strides = [1, 1]} : vector<64x128xf32> to vector<8x128xf32>
    %49 = arith.truncf %46 : vector<8x128xf32> to vector<8x128xbf16>
    %cst_19 = arith.constant dense<0.000000e+00> : vector<8x128xf32>
    %50 = tpu.matmul %49, %14, %cst_19 {dimension_numbers = #tpu.dot_dimension_numbers<[1], [0], [0], [1], [0, 0, 1, 1], [], []>} : vector<8x128xbf16>, vector<128x128xbf16>, vector<8x128xf32> -> vector<8x128xf32>
    %51 = arith.addf %48, %50 : vector<8x128xf32>
    %52 = math.tanh %51 : vector<8x128xf32>
    %c48 = arith.constant 48 : index
    %c0_20 = arith.constant 0 : index
    %53 = vector.load %arg7[%c48, %c0_20] : memref<64x128xf32, #tpu.memory_space<vmem>>, vector<8x128xf32>
    tpu.vector_store %arg7[%c48, %c0_20], %52 {strides = array<i32>} : memref<64x128xf32, #tpu.memory_space<vmem>>, vector<8x128xf32>,
    %54 = vector.extract_strided_slice %13 {offsets = [56, 0], sizes = [8, 128], strides = [1, 1]} : vector<64x128xf32> to vector<8x128xf32>
    %55 = arith.truncf %52 : vector<8x128xf32> to vector<8x128xbf16>
    %cst_21 = arith.constant dense<0.000000e+00> : vector<8x128xf32>
    %56 = tpu.matmul %55, %14, %cst_21 {dimension_numbers = #tpu.dot_dimension_numbers<[1], [0], [0], [1], [0, 0, 1, 1], [], []>} : vector<8x128xbf16>, vector<128x128xbf16>, vector<8x128xf32> -> vector<8x128xf32>
    %57 = arith.addf %54, %56 : vector<8x128xf32>
    %58 = math.tanh %57 : vector<8x128xf32>
    %c56 = arith.constant 56 : index
    %c0_22 = arith.constant 0 : index
    %59 = vector.load %arg7[%c56, %c0_22] : memref<64x128xf32, #tpu.memory_space<vmem>>, vector<8x128xf32>
    tpu.vector_store %arg7[%c56, %c0_22], %58 {strides = array<i32>} : memref<64x128xf32, #tpu.memory_space<vmem>>, vector<8x128xf32>,
    %c0_23 = arith.constant 0 : index
    %c0_24 = arith.constant 0 : index
    %60 = vector.load %arg7[%c0_23, %c0_24] : memref<64x128xf32, #tpu.memory_space<vmem>>, vector<64x128xf32>
    %61 = arith.truncf %60 : vector<64x128xf32> to vector<64x128xbf16>
    %c0_25 = arith.constant 0 : index
    %c0_26 = arith.constant 0 : index
    %62 = vector.load %arg5[%c0_25, %c0_26] : memref<128x128xbf16, #tpu.memory_space<vmem>>, vector<128x128xbf16>
    %cst_27 = arith.constant dense<0.000000e+00> : vector<64x128xf32>
    %63 = tpu.matmul %61, %62, %cst_27 {dimension_numbers = #tpu.dot_dimension_numbers<[1], [0], [0], [1], [0, 0, 1, 1], [], []>} : vector<64x128xbf16>, vector<128x128xbf16>, vector<64x128xf32> -> vector<64x128xf32>
    %c0_28 = arith.constant 0 : index
    %c0_29 = arith.constant 0 : index
    %64 = vector.load %arg6[%c0_28, %c0_29] : memref<1x128xf32, #tpu.memory_space<vmem>>, vector<1x128xf32>
    %65 = vector.broadcast %64 : vector<1x128xf32> to vector<64x128xf32>
    %66 = arith.addf %63, %65 : vector<64x128xf32>
    %67 = tpu.iota {dimensions = array<i32: 1>} : vector<64x128xi32>
    %c9_i32 = arith.constant 9 : i32
    %68 = vector.broadcast %c9_i32 : i32 to vector<64x128xi32>
    %69 = arith.cmpi slt, %67, %68 : vector<64x128xi32>
    %cst_30 = arith.constant -1.000000e+30 : f32
    %70 = vector.broadcast %cst_30 : f32 to vector<64x128xf32>
    %71 = arith.select %69, %66, %70 : vector<64x128xi1>, vector<64x128xf32>
    %cst_31 = arith.constant dense<0xFF800000> : vector<64xf32>
    %72 = vector.multi_reduction <maximumf>, %71, %cst_31 [1] : vector<64x128xf32> to vector<64xf32>
    %73 = vector.shape_cast %72 : vector<64xf32> to vector<64x1xf32>
    %74 = vector.broadcast %73 : vector<64x1xf32> to vector<64x128xf32>
    %75 = arith.subf %71, %74 : vector<64x128xf32>
    %76 = math.exp %75 : vector<64x128xf32>
    %cst_32 = arith.constant dense<0.000000e+00> : vector<64xf32>
    %77 = vector.multi_reduction <add>, %76, %cst_32 [1] : vector<64x128xf32> to vector<64xf32>
    %78 = vector.shape_cast %77 : vector<64xf32> to vector<64x1xf32>
    %79 = math.log %78 : vector<64x1xf32>
    %80 = arith.addf %73, %79 : vector<64x1xf32>
    %81 = vector.broadcast %2 : vector<64x1xi32> to vector<64x128xi32>
    %82 = arith.cmpi eq, %67, %81 : vector<64x128xi32>
    %cst_33 = arith.constant 0.000000e+00 : f32
    %83 = vector.broadcast %cst_33 : f32 to vector<64x128xf32>
    %84 = arith.select %82, %71, %83 : vector<64x128xi1>, vector<64x128xf32>
    %cst_34 = arith.constant dense<0.000000e+00> : vector<64xf32>
    %85 = vector.multi_reduction <add>, %84, %cst_34 [1] : vector<64x128xf32> to vector<64xf32>
    %86 = vector.shape_cast %85 : vector<64xf32> to vector<64x1xf32>
    %87 = arith.subf %80, %86 : vector<64x1xf32>
    %88 = tpu.iota {dimensions = array<i32: 0>} : vector<64x1xi32>
    %c40_i32 = arith.constant 40 : i32
    %89 = vector.broadcast %c40_i32 : i32 to vector<64x1xi32>
    %90 = arith.cmpi sge, %88, %89 : vector<64x1xi32>
    %91 = arith.extui %90 : vector<64x1xi1> to vector<64x1xi32>
    %92 = arith.sitofp %91 : vector<64x1xi32> to vector<64x1xf32>
    %93 = vector.broadcast %73 : vector<64x1xf32> to vector<64x128xf32>
    %94 = arith.cmpf oeq, %71, %93 : vector<64x128xf32>
    %c128_i32 = arith.constant 128 : i32
    %95 = vector.broadcast %c128_i32 : i32 to vector<64x128xi32>
    %96 = arith.select %94, %67, %95 : vector<64x128xi1>, vector<64x128xi32>
    %cst_35 = arith.constant dense<2147483647> : vector<64xi32>
    %97 = vector.multi_reduction <minsi>, %96, %cst_35 [1] : vector<64x128xi32> to vector<64xi32>
    %98 = vector.shape_cast %97 : vector<64xi32> to vector<64x1xi32>
    %99 = arith.cmpi eq, %98, %2 : vector<64x1xi32>
    %100 = arith.extui %99 : vector<64x1xi1> to vector<64x1xi32>
    %101 = arith.sitofp %100 : vector<64x1xi32> to vector<64x1xf32>
    %cst_36 = arith.constant dense<0.000000e+00> : vector<1xf32>
    %102 = vector.multi_reduction <add>, %87, %cst_36 [0] : vector<64x1xf32> to vector<1xf32>
    %103 = vector.shape_cast %102 : vector<1xf32> to vector<1x1xf32>
    %cst_37 = arith.constant 1.250000e-01 : f32
    %104 = vector.broadcast %cst_37 : f32 to vector<1x1xf32>
    %105 = arith.mulf %103, %104 : vector<1x1xf32>
    %106 = arith.mulf %87, %92 : vector<64x1xf32>
    %cst_38 = arith.constant dense<0.000000e+00> : vector<1xf32>
    %107 = vector.multi_reduction <add>, %106, %cst_38 [0] : vector<64x1xf32> to vector<1xf32>
    %108 = vector.shape_cast %107 : vector<1xf32> to vector<1x1xf32>
    %cst_39 = arith.constant 1.250000e-01 : f32
    %109 = vector.broadcast %cst_39 : f32 to vector<1x1xf32>
    %110 = arith.mulf %108, %109 : vector<1x1xf32>
    %111 = arith.mulf %101, %92 : vector<64x1xf32>
    %cst_40 = arith.constant dense<0.000000e+00> : vector<1xf32>
    %112 = vector.multi_reduction <add>, %111, %cst_40 [0] : vector<64x1xf32> to vector<1xf32>
    %113 = vector.shape_cast %112 : vector<1xf32> to vector<1x1xf32>
    %114 = tpu.iota {dimensions = array<i32: 1>} : vector<1x128xi32>
    %c0_i32 = arith.constant 0 : i32
    %115 = vector.broadcast %c0_i32 : i32 to vector<1x128xi32>
    %116 = arith.cmpi eq, %114, %115 : vector<1x128xi32>
    %c1_i32 = arith.constant 1 : i32
    %117 = vector.broadcast %c1_i32 : i32 to vector<1x128xi32>
    %118 = arith.cmpi eq, %114, %117 : vector<1x128xi32>
    %c2_i32 = arith.constant 2 : i32
    %119 = vector.broadcast %c2_i32 : i32 to vector<1x128xi32>
    %120 = arith.cmpi eq, %114, %119 : vector<1x128xi32>
    %cst_41 = arith.constant 0.000000e+00 : f32
    %121 = vector.shape_cast %113 : vector<1x1xf32> to vector<1x1xf32>
    %122 = vector.broadcast %121 : vector<1x1xf32> to vector<1x128xf32>
    %123 = vector.broadcast %cst_41 : f32 to vector<1x128xf32>
    %124 = arith.select %120, %122, %123 : vector<1x128xi1>, vector<1x128xf32>
    %125 = vector.shape_cast %110 : vector<1x1xf32> to vector<1x1xf32>
    %126 = vector.broadcast %125 : vector<1x1xf32> to vector<1x128xf32>
    %127 = arith.select %118, %126, %124 : vector<1x128xi1>, vector<1x128xf32>
    %128 = vector.shape_cast %105 : vector<1x1xf32> to vector<1x1xf32>
    %129 = vector.broadcast %128 : vector<1x1xf32> to vector<1x128xf32>
    %130 = arith.select %116, %129, %127 : vector<1x128xi1>, vector<1x128xf32>
    %c0_42 = arith.constant 0 : index
    %c0_43 = arith.constant 0 : index
    %131 = vector.load %arg8[%c0_42, %c0_43] : memref<1x128xf32, #tpu.memory_space<vmem>>, vector<1x128xf32>
    tpu.vector_store %arg8[%c0_42, %c0_43], %130 {strides = array<i32>} : memref<1x128xf32, #tpu.memory_space<vmem>>, vector<1x128xf32>,
    return
  }
  func.func @transform_0(%arg0: i32) -> (i32, i32) {
    %c0_i32 = arith.constant 0 : i32
    %c0_i32_0 = arith.constant 0 : i32
    %c0_i32_1 = arith.constant 0 : i32
    return %c0_i32, %c0_i32_0 : i32, i32
  }
  func.func @transform_1(%arg0: i32) -> (i32, i32) {
    %c0_i32 = arith.constant 0 : i32
    %c0_i32_0 = arith.constant 0 : i32
    %c0_i32_1 = arith.constant 0 : i32
    return %c0_i32, %c0_i32_0 : i32, i32
  }
  func.func @transform_2(%arg0: i32) -> (i32, i32) {
    %c0_i32 = arith.constant 0 : i32
    %c0_i32_0 = arith.constant 0 : i32
    %c0_i32_1 = arith.constant 0 : i32
    return %c0_i32, %c0_i32_0 : i32, i32
  }
  func.func @transform_3(%arg0: i32) -> (i32, i32) {
    %c0_i32 = arith.constant 0 : i32
    %c0_i32_0 = arith.constant 0 : i32
    %c0_i32_1 = arith.constant 0 : i32
    return %c0_i32, %c0_i32_0 : i32, i32
  }
  func.func @transform_4(%arg0: i32) -> (i32, i32) {
    %c0_i32 = arith.constant 0 : i32
    %c0_i32_0 = arith.constant 0 : i32
    %c0_i32_1 = arith.constant 0 : i32
    return %c0_i32, %c0_i32_0 : i32, i32
  }
  func.func @transform_5(%arg0: i32) -> (i32, i32) {
    %c0_i32 = arith.constant 0 : i32
    %c0_i32_0 = arith.constant 0 : i32
    %c0_i32_1 = arith.constant 0 : i32
    return %c0_i32, %c0_i32_0 : i32, i32
  }
  func.func @transform_6(%arg0: i32) -> (i32, i32) {
    %c0_i32 = arith.constant 0 : i32
    %c0_i32_0 = arith.constant 0 : i32
    %c0_i32_1 = arith.constant 0 : i32
    return %c0_i32, %c0_i32_0 : i32, i32
  }
  func.func @transform_7(%arg0: i32) -> (i32, i32) {
    %c0_i32 = arith.constant 0 : i32
    %c0_i32_0 = arith.constant 0 : i32
    %c0_i32_1 = arith.constant 0 : i32
    return %c0_i32, %c0_i32_0 : i32, i32
  }
}

</mosaic_0001>

<llo_original>
// kernel: model_forward.1
$region0: #{model_forward.1}
  #allocation0 [shape = 'u32[]', space=smem, size = 0x4, offset = 0x4, fixed_abs, tag = 'smem constant byte address 0x4 - core index']
  #allocation1 [shape = 'u32[144,128]{1,0:T(1,128)}', space=vmem, size = 0x12000, scoped, tag = 'internal scratch']
  %s0 = inlined_call_operand.vmem [shape: s32[64,2], index: 0, kind: input, shape index: {}]
  %s1 = inlined_call_operand.vmem [shape: bf16[128,128], index: 1, kind: input, shape index: {}]
  %s2 = inlined_call_operand.vmem [shape: bf16[128,128], index: 2, kind: input, shape index: {}]
  %s3 = inlined_call_operand.vmem [shape: f32[1,128], index: 3, kind: input, shape index: {}]
  %s4 = inlined_call_operand.vmem [shape: bf16[128,128], index: 4, kind: input, shape index: {}]
  %s5 = inlined_call_operand.vmem [shape: f32[1,128], index: 5, kind: input, shape index: {}]
  %s6 = inlined_call_operand.hbm [shape: f32[64,128], index: 6, kind: output, shape index: {0}]
  %s7 = inlined_call_operand.vmem [shape: f32[1,128], index: 7, kind: output, shape index: {1}]
  %8 = xla_tuple %s6, %s7
  %s9 = sld [smem:[#allocation0]]
  $region42: #{model_forward.1} parent=0
    _
  %s11 = ssub.s32 1, %s9
  %s12 = scalar_select 0, %s11, %s9
  $region1: #{model_forward.1} parent=0
    #allocation2 [shape = 'u8[32768]{0}', space=vmem, size = 0x8000, scoped, tag = 'output window, operand 0, single buffered']
    #allocation3 [shape = 's32[1]{0}', space=sflag, size = 0x4, scoped, tag = 'scoped memory for model_forward.1']
    %13 = vsyncpa [#allocation3], 0
    // Predicated region
    $region2: #{model_forward.1} parent=1 // pred_check
      _
    $region3: #{model_forward.1} parent=1 // pred_check_branch
      %15 = sbr.rel (0) target = $region5
    $region4: #{model_forward.1} parent=1 // pred_region
      _
    $region5: #{model_forward.1} parent=1 // pred_fallthru
      _
    // Predicated region
    $region6: #{model_forward.1} parent=1 // pred_check
      _
    $region7: #{model_forward.1} parent=1 // pred_check_branch
      %17 = sbr.rel (0) target = $region9
    $region8: #{model_forward.1} parent=1 // pred_region
      _
    $region9: #{model_forward.1} parent=1 // pred_fallthru
      _
    // Predicated region
    $region10: #{model_forward.1} parent=1 // pred_check
      _
    $region11: #{model_forward.1} parent=1 // pred_check_branch
      %19 = sbr.rel (0) target = $region13
    $region12: #{model_forward.1} parent=1 // pred_region
      _
    $region13: #{model_forward.1} parent=1 // pred_fallthru
      _
    // Predicated region
    $region14: #{model_forward.1} parent=1 // pred_check
      _
    $region15: #{model_forward.1} parent=1 // pred_check_branch
      %21 = sbr.rel (0) target = $region17
    $region16: #{model_forward.1} parent=1 // pred_region
      _
    $region17: #{model_forward.1} parent=1 // pred_fallthru
      _
    // Predicated region
    $region18: #{model_forward.1} parent=1 // pred_check
      _
    $region19: #{model_forward.1} parent=1 // pred_check_branch
      %23 = sbr.rel (0) target = $region21
    $region20: #{model_forward.1} parent=1 // pred_region
      _
    $region21: #{model_forward.1} parent=1 // pred_fallthru
      _
    // Predicated region
    $region22: #{model_forward.1} parent=1 // pred_check
      _
    $region23: #{model_forward.1} parent=1 // pred_check_branch
      %25 = sbr.rel (0) target = $region25
    $region24: #{model_forward.1} parent=1 // pred_region
      _
    $region25: #{model_forward.1} parent=1 // pred_fallthru
      _
    %v27 = vld [vmem:[%s0] sm:$0xff]
    %v28 = vld [vmem:[%s0 + $0x8] sm:$0xff]
    %v29 = vld [vmem:[%s0 + $0x10] sm:$0xff]
    %v30 = vld [vmem:[%s0 + $0x18] sm:$0xff]
    %v31 = vld [vmem:[%s0 + $0x20] sm:$0xff]
    %v32 = vld [vmem:[%s0 + $0x28] sm:$0xff]
    %v33 = vld [vmem:[%s0 + $0x30] sm:$0xff]
    %v34 = vld [vmem:[%s0 + $0x38] sm:$0xff]
    %v35 = vlaneseq
    %v36 = vand.u32 %v35, 127
    %37 = vset.pattern.permute.xlu0 0
    %38 = vperm.xlu0 %37, %v27
    %v39 = vpop.permute.xlu0 %38
    %40 = vset.pattern.permute.xlu0 0
    %41 = vperm.xlu0 %40, %v28
    %v42 = vpop.permute.xlu0 %41
    %43 = vset.pattern.permute.xlu0 0
    %44 = vperm.xlu0 %43, %v29
    %v45 = vpop.permute.xlu0 %44
    %46 = vset.pattern.permute.xlu0 0
    %47 = vperm.xlu0 %46, %v30
    %v48 = vpop.permute.xlu0 %47
    %49 = vset.pattern.permute.xlu0 0
    %50 = vperm.xlu0 %49, %v31
    %v51 = vpop.permute.xlu0 %50
    %52 = vset.pattern.permute.xlu0 0
    %53 = vperm.xlu0 %52, %v32
    %v54 = vpop.permute.xlu0 %53
    %55 = vset.pattern.permute.xlu0 0
    %56 = vperm.xlu0 %55, %v33
    %v57 = vpop.permute.xlu0 %56
    %58 = vset.pattern.permute.xlu0 0
    %59 = vperm.xlu0 %58, %v34
    %v60 = vpop.permute.xlu0 %59
    %vm61 = vcmp.eq.s32.totalorder %v36, %v39
    %vm62 = vcmp.eq.s32.totalorder %v36, %v42
    %vm63 = vcmp.eq.s32.totalorder %v36, %v45
    %vm64 = vcmp.eq.s32.totalorder %v36, %v48
    %vm65 = vcmp.eq.s32.totalorder %v36, %v51
    %vm66 = vcmp.eq.s32.totalorder %v36, %v54
    %vm67 = vcmp.eq.s32.totalorder %v36, %v57
    %vm68 = vcmp.eq.s32.totalorder %v36, %v60
    %v69 = vsel %vm61, 1, 0
    %v70 = vsel %vm62, 1, 0
    %v71 = vsel %vm63, 1, 0
    %v72 = vsel %vm64, 1, 0
    %v73 = vsel %vm65, 1, 0
    %v74 = vsel %vm66, 1, 0
    %v75 = vsel %vm67, 1, 0
    %v76 = vsel %vm68, 1, 0
    %v77 = vcvt.s32.f32 %v69
    %v78 = vcvt.s32.f32 %v70
    %v79 = vcvt.s32.f32 %v71
    %v80 = vcvt.s32.f32 %v72
    %v81 = vcvt.s32.f32 %v73
    %v82 = vcvt.s32.f32 %v74
    %v83 = vcvt.s32.f32 %v75
    %v84 = vcvt.s32.f32 %v76
    %v85 = vpack.c.bf16 %v78, %v77
    %v86 = vpack.c.bf16 %v80, %v79
    %v87 = vpack.c.bf16 %v82, %v81
    %v88 = vpack.c.bf16 %v84, %v83
    %v89 = vld [vmem:[%s1] sm:$0xf]
    %v90 = vld [vmem:[%s1 + $0x4] sm:$0xf]
    %v91 = vld [vmem:[%s1 + $0x8] sm:$0xf]
    %v92 = vld [vmem:[%s1 + $0xc] sm:$0xf]
    %v93 = vld [vmem:[%s1 + $0x10] sm:$0xf]
    %v94 = vld [vmem:[%s1 + $0x14] sm:$0xf]
    %v95 = vld [vmem:[%s1 + $0x18] sm:$0xf]
    %v96 = vld [vmem:[%s1 + $0x1c] sm:$0xf]
    %v97 = vld [vmem:[%s1 + $0x20] sm:$0xf]
    %v98 = vld [vmem:[%s1 + $0x24] sm:$0xf]
    %v99 = vld [vmem:[%s1 + $0x28] sm:$0xf]
    %v100 = vld [vmem:[%s1 + $0x2c] sm:$0xf]
    %v101 = vld [vmem:[%s1 + $0x30] sm:$0xf]
    %v102 = vld [vmem:[%s1 + $0x34] sm:$0xf]
    %v103 = vld [vmem:[%s1 + $0x38] sm:$0xf]
    %v104 = vld [vmem:[%s1 + $0x3c] sm:$0xf]
    %v105 = vld [vmem:[%s3] sm:$0x1]
    %v107 = vlaneseq
    %v108 = vshrl.u32 %v107, 7
    %v109 = vsub.s32 0, %v108
    %v110 = vrot.slane %v105, %v109
    %v128 = vunpack.c.l.b16 %v89
    %v129 = vunpack.c.l.b16 %v90
    %v130 = vunpack.c.l.b16 %v91
    %v131 = vunpack.c.l.b16 %v92
    %v132 = vunpack.c.l.b16 %v93
    %v133 = vunpack.c.l.b16 %v94
    %v134 = vunpack.c.l.b16 %v95
    %v135 = vunpack.c.l.b16 %v96
    %v136 = vunpack.c.l.b16 %v97
    %v137 = vunpack.c.l.b16 %v98
    %v138 = vunpack.c.l.b16 %v99
    %v139 = vunpack.c.l.b16 %v100
    %v140 = vunpack.c.l.b16 %v101
    %v141 = vunpack.c.l.b16 %v102
    %v142 = vunpack.c.l.b16 %v103
    %v143 = vunpack.c.l.b16 %v104
    %v144 = vpack.c.b16 %v129, %v128
    %v145 = vpack.c.b16 %v131, %v130
    %v146 = vpack.c.b16 %v133, %v132
    %v147 = vpack.c.b16 %v135, %v134
    %v148 = vpack.c.b16 %v137, %v136
    %v149 = vpack.c.b16 %v139, %v138
    %v150 = vpack.c.b16 %v141, %v140
    %v151 = vpack.c.b16 %v143, %v142
    %160 = vmatprep.subr.bf16.mxu0 0
    %161 = vmatpush1.bf16.msra.mxu0 %v144
    %162 = vmatprep.subr.bf16.mxu0 0
    %163 = vmatpush1.bf16.msra.mxu0 %v145
    %164 = vmatprep.subr.bf16.mxu0 0
    %165 = vmatpush1.bf16.msra.mxu0 %v146
    %166 = vmatprep.subr.bf16.mxu0 0
    %167 = vmatpush1.bf16.msra.mxu0 %v147
    %168 = vmatprep.subr.bf16.mxu0 0
    %169 = vmatpush1.bf16.msra.mxu0 %v148
    %170 = vmatprep.subr.bf16.mxu0 0
    %171 = vmatpush1.bf16.msra.mxu0 %v149
    %172 = vmatprep.subr.bf16.mxu0 0
    %173 = vmatpush1.bf16.msra.mxu0 %v150
    %174 = vmatprep.subr.bf16.mxu0 0
    %175 = vmatpush1.bf16.msra.mxu0 %v151
    %176 = vmatprep.subr.bf16.mxu0 0
    %177 = vmatpush1.bf16.msra.mxu0 0
    %178 = vmatprep.subr.bf16.mxu0 0
    %179 = vmatpush1.bf16.msra.mxu0 0
    %180 = vmatprep.subr.bf16.mxu0 0
    %181 = vmatpush1.bf16.msra.mxu0 0
    %182 = vmatprep.subr.bf16.mxu0 0
    %183 = vmatpush1.bf16.msra.mxu0 0
    %184 = vmatprep.subr.bf16.mxu0 0
    %185 = vmatpush1.bf16.msra.mxu0 0
    %186 = vmatprep.subr.bf16.mxu0 0
    %187 = vmatpush1.bf16.msra.mxu0 0
    %188 = vmatprep.subr.bf16.mxu0 0
    %189 = vmatpush1.bf16.msra.mxu0 0
    %190 = vmatprep.subr.bf16.mxu0 0
    %191 = vmatpush1.bf16.msra.mxu0 0
    %192 = vmatprep.mubr.bf16.mxu0 0
    %193 = vmatmul.mubr.bf16.gmra.mrb[0].mxu0 %v85
    %v194 = vpop.f32.mrb[0].mxu0
    %v195 = vadd.f32 %v110, %v194
    %v196 = vpop.f32.mrb[0].mxu0
    %v197 = vpop.f32.mrb[0].mxu0
    %v198 = vadd.f32 %v110, %v197
    %v199 = vpop.f32.mrb[0].mxu0
    %200 = vmatprep.mubr.bf16.mxu0 0
    %201 = vmatmul.mubr.bf16.gmra.mrb[0].mxu0 %v86
    %v202 = vpop.f32.mrb[0].mxu0
    %v203 = vadd.f32 %v110, %v202
    %v204 = vpop.f32.mrb[0].mxu0
    %v205 = vpop.f32.mrb[0].mxu0
    %v206 = vadd.f32 %v110, %v205
    %v207 = vpop.f32.mrb[0].mxu0
    %208 = vmatprep.mubr.bf16.mxu0 0
    %209 = vmatmul.mubr.bf16.gmra.mrb[0].mxu0 %v87
    %v210 = vpop.f32.mrb[0].mxu0
    %v211 = vadd.f32 %v110, %v210
    %v212 = vpop.f32.mrb[0].mxu0
    %v213 = vpop.f32.mrb[0].mxu0
    %v214 = vadd.f32 %v110, %v213
    %v215 = vpop.f32.mrb[0].mxu0
    %216 = vmatprep.mubr.bf16.mxu0 0
    %217 = vmatmul.mubr.bf16.gmra.mrb[0].mxu0 %v88
    %v218 = vpop.f32.mrb[0].mxu0
    %v219 = vadd.f32 %v110, %v218
    %v220 = vpop.f32.mrb[0].mxu0
    %v221 = vpop.f32.mrb[0].mxu0
    %v222 = vadd.f32 %v110, %v221
    %v223 = vpop.f32.mrb[0].mxu0
    %224 = vdwg.mxu0
    %v225 = vld [vmem:[%s2] sm:$0xf]
    %v226 = vld [vmem:[%s2 + $0x4] sm:$0xf]
    %v227 = vld [vmem:[%s2 + $0x8] sm:$0xf]
    %v228 = vld [vmem:[%s2 + $0xc] sm:$0xf]
    %v229 = vld [vmem:[%s2 + $0x10] sm:$0xf]
    %v230 = vld [vmem:[%s2 + $0x14] sm:$0xf]
    %v231 = vld [vmem:[%s2 + $0x18] sm:$0xf]
    %v232 = vld [vmem:[%s2 + $0x1c] sm:$0xf]
    %v233 = vld [vmem:[%s2 + $0x20] sm:$0xf]
    %v234 = vld [vmem:[%s2 + $0x24] sm:$0xf]
    %v235 = vld [vmem:[%s2 + $0x28] sm:$0xf]
    %v236 = vld [vmem:[%s2 + $0x2c] sm:$0xf]
    %v237 = vld [vmem:[%s2 + $0x30] sm:$0xf]
    %v238 = vld [vmem:[%s2 + $0x34] sm:$0xf]
    %v239 = vld [vmem:[%s2 + $0x38] sm:$0xf]
    %v240 = vld [vmem:[%s2 + $0x3c] sm:$0xf]
    %v241 = vtanh.pop %v195
    %242 = vst [vmem:[#allocation2] sm:$0xff] %v241
    %v243 = vpack.c.bf16 %v241, %v241
    %v260 = vunpack.c.l.b16 %v225
    %v261 = vunpack.c.l.b16 %v226
    %v262 = vunpack.c.l.b16 %v227
    %v263 = vunpack.c.l.b16 %v228
    %v264 = vunpack.c.l.b16 %v229
    %v265 = vunpack.c.l.b16 %v230
    %v266 = vunpack.c.l.b16 %v231
    %v267 = vunpack.c.l.b16 %v232
    %v268 = vunpack.c.l.b16 %v233
    %v269 = vunpack.c.l.b16 %v234
    %v270 = vunpack.c.l.b16 %v235
    %v271 = vunpack.c.l.b16 %v236
    %v272 = vunpack.c.l.b16 %v237
    %v273 = vunpack.c.l.b16 %v238
    %v274 = vunpack.c.l.b16 %v239
    %v275 = vunpack.c.l.b16 %v240
    %v276 = vpack.c.b16 %v261, %v260
    %v277 = vpack.c.b16 %v263, %v262
    %v278 = vpack.c.b16 %v265, %v264
    %v279 = vpack.c.b16 %v267, %v266
    %v280 = vpack.c.b16 %v269, %v268
    %v281 = vpack.c.b16 %v271, %v270
    %v282 = vpack.c.b16 %v273, %v272
    %v283 = vpack.c.b16 %v275, %v274
    %292 = vmatprep.subr.bf16.mxu0 0
    %293 = vmatpush1.bf16.msra.mxu0 %v276
    %294 = vmatprep.subr.bf16.mxu0 0
    %295 = vmatpush1.bf16.msra.mxu0 %v277
    %296 = vmatprep.subr.bf16.mxu0 0
    %297 = vmatpush1.bf16.msra.mxu0 %v278
    %298 = vmatprep.subr.bf16.mxu0 0
    %299 = vmatpush1.bf16.msra.mxu0 %v279
    %300 = vmatprep.subr.bf16.mxu0 0
    %301 = vmatpush1.bf16.msra.mxu0 %v280
    %302 = vmatprep.subr.bf16.mxu0 0
    %303 = vmatpush1.bf16.msra.mxu0 %v281
    %304 = vmatprep.subr.bf16.mxu0 0
    %305 = vmatpush1.bf16.msra.mxu0 %v282
    %306 = vmatprep.subr.bf16.mxu0 0
    %307 = vmatpush1.bf16.msra.mxu0 %v283
    %308 = vmatprep.subr.bf16.mxu0 0
    %309 = vmatpush1.bf16.msra.mxu0 0
    %310 = vmatprep.subr.bf16.mxu0 0
    %311 = vmatpush1.bf16.msra.mxu0 0
    %312 = vmatprep.subr.bf16.mxu0 0
    %313 = vmatpush1.bf16.msra.mxu0 0
    %314 = vmatprep.subr.bf16.mxu0 0
    %315 = vmatpush1.bf16.msra.mxu0 0
    %316 = vmatprep.subr.bf16.mxu0 0
    %317 = vmatpush1.bf16.msra.mxu0 0
    %318 = vmatprep.subr.bf16.mxu0 0
    %319 = vmatpush1.bf16.msra.mxu0 0
    %320 = vmatprep.subr.bf16.mxu0 0
    %321 = vmatpush1.bf16.msra.mxu0 0
    %322 = vmatprep.subr.bf16.mxu0 0
    %323 = vmatpush1.bf16.msra.mxu0 0
    %324 = vmatprep.mubr.bf16.mxu0 0
    %325 = vmatmul.mubr.bf16.gmra.mrb[0].mxu0 %v243
    %v326 = vpop.f32.mrb[0].mxu0
    %v327 = vadd.f32 0.0, %v326
    %v328 = vpop.f32.mrb[0].mxu0
    %v329 = vpop.f32.mrb[0].mxu0
    %v330 = vpop.f32.mrb[0].mxu0
    %331 = vdwg.mxu0
    %v332 = vadd.f32 %v198, %v327
    %v333 = vtanh.pop %v332
    %334 = vst [vmem:[#allocation2 + $0x8] sm:$0xff] %v333
    %v335 = vpack.c.bf16 %v333, %v333
    %336 = vmatprep.subr.bf16.mxu0 0
    %337 = vmatpush1.bf16.msra.mxu0 %v276
    %338 = vmatprep.subr.bf16.mxu0 0
    %339 = vmatpush1.bf16.msra.mxu0 %v277
    %340 = vmatprep.subr.bf16.mxu0 0
    %341 = vmatpush1.bf16.msra.mxu0 %v278
    %342 = vmatprep.subr.bf16.mxu0 0
    %343 = vmatpush1.bf16.msra.mxu0 %v279
    %344 = vmatprep.subr.bf16.mxu0 0
    %345 = vmatpush1.bf16.msra.mxu0 %v280
    %346 = vmatprep.subr.bf16.mxu0 0
    %347 = vmatpush1.bf16.msra.mxu0 %v281
    %348 = vmatprep.subr.bf16.mxu0 0
    %349 = vmatpush1.bf16.msra.mxu0 %v282
    %350 = vmatprep.subr.bf16.mxu0 0
    %351 = vmatpush1.bf16.msra.mxu0 %v283
    %352 = vmatprep.subr.bf16.mxu0 0
    %353 = vmatpush1.bf16.msra.mxu0 0
    %354 = vmatprep.subr.bf16.mxu0 0
    %355 = vmatpush1.bf16.msra.mxu0 0
    %356 = vmatprep.subr.bf16.mxu0 0
    %357 = vmatpush1.bf16.msra.mxu0 0
    %358 = vmatprep.subr.bf16.mxu0 0
    %359 = vmatpush1.bf16.msra.mxu0 0
    %360 = vmatprep.subr.bf16.mxu0 0
    %361 = vmatpush1.bf16.msra.mxu0 0
    %362 = vmatprep.subr.bf16.mxu0 0
    %363 = vmatpush1.bf16.msra.mxu0 0
    %364 = vmatprep.subr.bf16.mxu0 0
    %365 = vmatpush1.bf16.msra.mxu0 0
    %366 = vmatprep.subr.bf16.mxu0 0
    %367 = vmatpush1.bf16.msra.mxu0 0
    %368 = vmatprep.mubr.bf16.mxu0 0
    %369 = vmatmul.mubr.bf16.gmra.mrb[0].mxu0 %v335
    %v370 = vpop.f32.mrb[0].mxu0
    %v371 = vadd.f32 0.0, %v370
    %v372 = vpop.f32.mrb[0].mxu0
    %v373 = vpop.f32.mrb[0].mxu0
    %v374 = vpop.f32.mrb[0].mxu0
    %375 = vdwg.mxu0
    %v376 = vadd.f32 %v203, %v371
    %v377 = vtanh.pop %v376
    %378 = vst [vmem:[#allocation2 + $0x10] sm:$0xff] %v377
    %v379 = vpack.c.bf16 %v377, %v377
    %380 = vmatprep.subr.bf16.mxu0 0
    %381 = vmatpush1.bf16.msra.mxu0 %v276
    %382 = vmatprep.subr.bf16.mxu0 0
    %383 = vmatpush1.bf16.msra.mxu0 %v277
    %384 = vmatprep.subr.bf16.mxu0 0
    %385 = vmatpush1.bf16.msra.mxu0 %v278
    %386 = vmatprep.subr.bf16.mxu0 0
    %387 = vmatpush1.bf16.msra.mxu0 %v279
    %388 = vmatprep.subr.bf16.mxu0 0
    %389 = vmatpush1.bf16.msra.mxu0 %v280
    %390 = vmatprep.subr.bf16.mxu0 0
    %391 = vmatpush1.bf16.msra.mxu0 %v281
    %392 = vmatprep.subr.bf16.mxu0 0
    %393 = vmatpush1.bf16.msra.mxu0 %v282
    %394 = vmatprep.subr.bf16.mxu0 0
    %395 = vmatpush1.bf16.msra.mxu0 %v283
    %396 = vmatprep.subr.bf16.mxu0 0
    %397 = vmatpush1.bf16.msra.mxu0 0
    %398 = vmatprep.subr.bf16.mxu0 0
    %399 = vmatpush1.bf16.msra.mxu0 0
    %400 = vmatprep.subr.bf16.mxu0 0
    %401 = vmatpush1.bf16.msra.mxu0 0
    %402 = vmatprep.subr.bf16.mxu0 0
    %403 = vmatpush1.bf16.msra.mxu0 0
    %404 = vmatprep.subr.bf16.mxu0 0
    %405 = vmatpush1.bf16.msra.mxu0 0
    %406 = vmatprep.subr.bf16.mxu0 0
    %407 = vmatpush1.bf16.msra.mxu0 0
    %408 = vmatprep.subr.bf16.mxu0 0
    %409 = vmatpush1.bf16.msra.mxu0 0
    %410 = vmatprep.subr.bf16.mxu0 0
    %411 = vmatpush1.bf16.msra.mxu0 0
    %412 = vmatprep.mubr.bf16.mxu0 0
    %413 = vmatmul.mubr.bf16.gmra.mrb[0].mxu0 %v379
    %v414 = vpop.f32.mrb[0].mxu0
    %v415 = vadd.f32 0.0, %v414
    %v416 = vpop.f32.mrb[0].mxu0
    %v417 = vpop.f32.mrb[0].mxu0
    %v418 = vpop.f32.mrb[0].mxu0
    %419 = vdwg.mxu0
    %v420 = vadd.f32 %v206, %v415
    %v421 = vtanh.pop %v420
    %422 = vst [vmem:[#allocation2 + $0x18] sm:$0xff] %v421
    %v423 = vpack.c.bf16 %v421, %v421
    %424 = vmatprep.subr.bf16.mxu0 0
    %425 = vmatpush1.bf16.msra.mxu0 %v276
    %426 = vmatprep.subr.bf16.mxu0 0
    %427 = vmatpush1.bf16.msra.mxu0 %v277
    %428 = vmatprep.subr.bf16.mxu0 0
    %429 = vmatpush1.bf16.msra.mxu0 %v278
    %430 = vmatprep.subr.bf16.mxu0 0
    %431 = vmatpush1.bf16.msra.mxu0 %v279
    %432 = vmatprep.subr.bf16.mxu0 0
    %433 = vmatpush1.bf16.msra.mxu0 %v280
    %434 = vmatprep.subr.bf16.mxu0 0
    %435 = vmatpush1.bf16.msra.mxu0 %v281
    %436 = vmatprep.subr.bf16.mxu0 0
    %437 = vmatpush1.bf16.msra.mxu0 %v282
    %438 = vmatprep.subr.bf16.mxu0 0
    %439 = vmatpush1.bf16.msra.mxu0 %v283
    %440 = vmatprep.subr.bf16.mxu0 0
    %441 = vmatpush1.bf16.msra.mxu0 0
    %442 = vmatprep.subr.bf16.mxu0 0
    %443 = vmatpush1.bf16.msra.mxu0 0
    %444 = vmatprep.subr.bf16.mxu0 0
    %445 = vmatpush1.bf16.msra.mxu0 0
    %446 = vmatprep.subr.bf16.mxu0 0
    %447 = vmatpush1.bf16.msra.mxu0 0
    %448 = vmatprep.subr.bf16.mxu0 0
    %449 = vmatpush1.bf16.msra.mxu0 0
    %450 = vmatprep.subr.bf16.mxu0 0
    %451 = vmatpush1.bf16.msra.mxu0 0
    %452 = vmatprep.subr.bf16.mxu0 0
    %453 = vmatpush1.bf16.msra.mxu0 0
    %454 = vmatprep.subr.bf16.mxu0 0
    %455 = vmatpush1.bf16.msra.mxu0 0
    %456 = vmatprep.mubr.bf16.mxu0 0
    %457 = vmatmul.mubr.bf16.gmra.mrb[0].mxu0 %v423
    %v458 = vpop.f32.mrb[0].mxu0
    %v459 = vadd.f32 0.0, %v458
    %v460 = vpop.f32.mrb[0].mxu0
    %v461 = vpop.f32.mrb[0].mxu0
    %v462 = vpop.f32.mrb[0].mxu0
    %463 = vdwg.mxu0
    %v464 = vadd.f32 %v211, %v459
    %v465 = vtanh.pop %v464
    %466 = vst [vmem:[#allocation2 + $0x20] sm:$0xff] %v465
    %v467 = vpack.c.bf16 %v465, %v465
    %468 = vmatprep.subr.bf16.mxu0 0
    %469 = vmatpush1.bf16.msra.mxu0 %v276
    %470 = vmatprep.subr.bf16.mxu0 0
    %471 = vmatpush1.bf16.msra.mxu0 %v277
    %472 = vmatprep.subr.bf16.mxu0 0
    %473 = vmatpush1.bf16.msra.mxu0 %v278
    %474 = vmatprep.subr.bf16.mxu0 0
    %475 = vmatpush1.bf16.msra.mxu0 %v279
    %476 = vmatprep.subr.bf16.mxu0 0
    %477 = vmatpush1.bf16.msra.mxu0 %v280
    %478 = vmatprep.subr.bf16.mxu0 0
    %479 = vmatpush1.bf16.msra.mxu0 %v281
    %480 = vmatprep.subr.bf16.mxu0 0
    %481 = vmatpush1.bf16.msra.mxu0 %v282
    %482 = vmatprep.subr.bf16.mxu0 0
    %483 = vmatpush1.bf16.msra.mxu0 %v283
    %484 = vmatprep.subr.bf16.mxu0 0
    %485 = vmatpush1.bf16.msra.mxu0 0
    %486 = vmatprep.subr.bf16.mxu0 0
    %487 = vmatpush1.bf16.msra.mxu0 0
    %488 = vmatprep.subr.bf16.mxu0 0
    %489 = vmatpush1.bf16.msra.mxu0 0
    %490 = vmatprep.subr.bf16.mxu0 0
    %491 = vmatpush1.bf16.msra.mxu0 0
    %492 = vmatprep.subr.bf16.mxu0 0
    %493 = vmatpush1.bf16.msra.mxu0 0
    %494 = vmatprep.subr.bf16.mxu0 0
    %495 = vmatpush1.bf16.msra.mxu0 0
    %496 = vmatprep.subr.bf16.mxu0 0
    %497 = vmatpush1.bf16.msra.mxu0 0
    %498 = vmatprep.subr.bf16.mxu0 0
    %499 = vmatpush1.bf16.msra.mxu0 0
    %500 = vmatprep.mubr.bf16.mxu0 0
    %501 = vmatmul.mubr.bf16.gmra.mrb[0].mxu0 %v467
    %v502 = vpop.f32.mrb[0].mxu0
    %v503 = vadd.f32 0.0, %v502
    %v504 = vpop.f32.mrb[0].mxu0
    %v505 = vpop.f32.mrb[0].mxu0
    %v506 = vpop.f32.mrb[0].mxu0
    %507 = vdwg.mxu0
    %v508 = vadd.f32 %v214, %v503
    %v509 = vtanh.pop %v508
    %510 = vst [vmem:[#allocation2 + $0x28] sm:$0xff] %v509
    %v511 = vpack.c.bf16 %v509, %v509
    %512 = vmatprep.subr.bf16.mxu0 0
    %513 = vmatpush1.bf16.msra.mxu0 %v276
    %514 = vmatprep.subr.bf16.mxu0 0
    %515 = vmatpush1.bf16.msra.mxu0 %v277
    %516 = vmatprep.subr.bf16.mxu0 0
    %517 = vmatpush1.bf16.msra.mxu0 %v278
    %518 = vmatprep.subr.bf16.mxu0 0
    %519 = vmatpush1.bf16.msra.mxu0 %v279
    %520 = vmatprep.subr.bf16.mxu0 0
    %521 = vmatpush1.bf16.msra.mxu0 %v280
    %522 = vmatprep.subr.bf16.mxu0 0
    %523 = vmatpush1.bf16.msra.mxu0 %v281
    %524 = vmatprep.subr.bf16.mxu0 0
    %525 = vmatpush1.bf16.msra.mxu0 %v282
    %526 = vmatprep.subr.bf16.mxu0 0
    %527 = vmatpush1.bf16.msra.mxu0 %v283
    %528 = vmatprep.subr.bf16.mxu0 0
    %529 = vmatpush1.bf16.msra.mxu0 0
    %530 = vmatprep.subr.bf16.mxu0 0
    %531 = vmatpush1.bf16.msra.mxu0 0
    %532 = vmatprep.subr.bf16.mxu0 0
    %533 = vmatpush1.bf16.msra.mxu0 0
    %534 = vmatprep.subr.bf16.mxu0 0
    %535 = vmatpush1.bf16.msra.mxu0 0
    %536 = vmatprep.subr.bf16.mxu0 0
    %537 = vmatpush1.bf16.msra.mxu0 0
    %538 = vmatprep.subr.bf16.mxu0 0
    %539 = vmatpush1.bf16.msra.mxu0 0
    %540 = vmatprep.subr.bf16.mxu0 0
    %541 = vmatpush1.bf16.msra.mxu0 0
    %542 = vmatprep.subr.bf16.mxu0 0
    %543 = vmatpush1.bf16.msra.mxu0 0
    %544 = vmatprep.mubr.bf16.mxu0 0
    %545 = vmatmul.mubr.bf16.gmra.mrb[0].mxu0 %v511
    %v546 = vpop.f32.mrb[0].mxu0
    %v547 = vadd.f32 0.0, %v546
    %v548 = vpop.f32.mrb[0].mxu0
    %v549 = vpop.f32.mrb[0].mxu0
    %v550 = vpop.f32.mrb[0].mxu0
    %551 = vdwg.mxu0
    %v552 = vadd.f32 %v219, %v547
    %v553 = vtanh.pop %v552
    %554 = vst [vmem:[#allocation2 + $0x30] sm:$0xff] %v553
    %v555 = vpack.c.bf16 %v553, %v553
    %556 = vmatprep.subr.bf16.mxu0 0
    %557 = vmatpush1.bf16.msra.mxu0 %v276
    %558 = vmatprep.subr.bf16.mxu0 0
    %559 = vmatpush1.bf16.msra.mxu0 %v277
    %560 = vmatprep.subr.bf16.mxu0 0
    %561 = vmatpush1.bf16.msra.mxu0 %v278
    %562 = vmatprep.subr.bf16.mxu0 0
    %563 = vmatpush1.bf16.msra.mxu0 %v279
    %564 = vmatprep.subr.bf16.mxu0 0
    %565 = vmatpush1.bf16.msra.mxu0 %v280
    %566 = vmatprep.subr.bf16.mxu0 0
    %567 = vmatpush1.bf16.msra.mxu0 %v281
    %568 = vmatprep.subr.bf16.mxu0 0
    %569 = vmatpush1.bf16.msra.mxu0 %v282
    %570 = vmatprep.subr.bf16.mxu0 0
    %571 = vmatpush1.bf16.msra.mxu0 %v283
    %572 = vmatprep.subr.bf16.mxu0 0
    %573 = vmatpush1.bf16.msra.mxu0 0
    %574 = vmatprep.subr.bf16.mxu0 0
    %575 = vmatpush1.bf16.msra.mxu0 0
    %576 = vmatprep.subr.bf16.mxu0 0
    %577 = vmatpush1.bf16.msra.mxu0 0
    %578 = vmatprep.subr.bf16.mxu0 0
    %579 = vmatpush1.bf16.msra.mxu0 0
    %580 = vmatprep.subr.bf16.mxu0 0
    %581 = vmatpush1.bf16.msra.mxu0 0
    %582 = vmatprep.subr.bf16.mxu0 0
    %583 = vmatpush1.bf16.msra.mxu0 0
    %584 = vmatprep.subr.bf16.mxu0 0
    %585 = vmatpush1.bf16.msra.mxu0 0
    %586 = vmatprep.subr.bf16.mxu0 0
    %587 = vmatpush1.bf16.msra.mxu0 0
    %588 = vmatprep.mubr.bf16.mxu0 0
    %589 = vmatmul.mubr.bf16.gmra.mrb[0].mxu0 %v555
    %v590 = vpop.f32.mrb[0].mxu0
    %v591 = vadd.f32 0.0, %v590
    %v592 = vpop.f32.mrb[0].mxu0
    %v593 = vpop.f32.mrb[0].mxu0
    %v594 = vpop.f32.mrb[0].mxu0
    %595 = vdwg.mxu0
    %v596 = vadd.f32 %v222, %v591
    %v597 = vtanh.pop %v596
    %598 = vst [vmem:[#allocation2 + $0x38] sm:$0xff] %v597
    %v599 = vld [vmem:[#allocation2] sm:$0xff]
    %v600 = vld [vmem:[#allocation2 + $0x8] sm:$0xff]
    %v601 = vld [vmem:[#allocation2 + $0x10] sm:$0xff]
    %v602 = vld [vmem:[#allocation2 + $0x18] sm:$0xff]
    %v603 = vld [vmem:[#allocation2 + $0x20] sm:$0xff]
    %v604 = vld [vmem:[#allocation2 + $0x28] sm:$0xff]
    %v605 = vld [vmem:[#allocation2 + $0x30] sm:$0xff]
    %v606 = vld [vmem:[#allocation2 + $0x38] sm:$0xff]
    %v607 = vpack.c.bf16 %v600, %v599
    %v608 = vpack.c.bf16 %v602, %v601
    %v609 = vpack.c.bf16 %v604, %v603
    %v610 = vpack.c.bf16 %v606, %v605
    %v611 = vld [vmem:[%s4] sm:$0xf]
    %v612 = vld [vmem:[%s4 + $0x4] sm:$0xf]
    %v613 = vld [vmem:[%s4 + $0x8] sm:$0xf]
    %v614 = vld [vmem:[%s4 + $0xc] sm:$0xf]
    %v615 = vld [vmem:[%s4 + $0x10] sm:$0xf]
    %v616 = vld [vmem:[%s4 + $0x14] sm:$0xf]
    %v617 = vld [vmem:[%s4 + $0x18] sm:$0xf]
    %v618 = vld [vmem:[%s4 + $0x1c] sm:$0xf]
    %v619 = vld [vmem:[%s4 + $0x20] sm:$0xf]
    %v620 = vld [vmem:[%s4 + $0x24] sm:$0xf]
    %v621 = vld [vmem:[%s4 + $0x28] sm:$0xf]
    %v622 = vld [vmem:[%s4 + $0x2c] sm:$0xf]
    %v623 = vld [vmem:[%s4 + $0x30] sm:$0xf]
    %v624 = vld [vmem:[%s4 + $0x34] sm:$0xf]
    %v625 = vld [vmem:[%s4 + $0x38] sm:$0xf]
    %v626 = vld [vmem:[%s4 + $0x3c] sm:$0xf]
    %v627 = vld [vmem:[%s5] sm:$0x1]
    %v629 = vlaneseq
    %v630 = vshrl.u32 %v629, 7
    %v631 = vsub.s32 0, %v630
    %v632 = vrot.slane %v627, %v631
    %v650 = vunpack.c.l.b16 %v611
    %v651 = vunpack.c.l.b16 %v612
    %v652 = vunpack.c.l.b16 %v613
    %v653 = vunpack.c.l.b16 %v614
    %v654 = vunpack.c.l.b16 %v615
    %v655 = vunpack.c.l.b16 %v616
    %v656 = vunpack.c.l.b16 %v617
    %v657 = vunpack.c.l.b16 %v618
    %v658 = vunpack.c.l.b16 %v619
    %v659 = vunpack.c.l.b16 %v620
    %v660 = vunpack.c.l.b16 %v621
    %v661 = vunpack.c.l.b16 %v622
    %v662 = vunpack.c.l.b16 %v623
    %v663 = vunpack.c.l.b16 %v624
    %v664 = vunpack.c.l.b16 %v625
    %v665 = vunpack.c.l.b16 %v626
    %v666 = vpack.c.b16 %v651, %v650
    %v667 = vpack.c.b16 %v653, %v652
    %v668 = vpack.c.b16 %v655, %v654
    %v669 = vpack.c.b16 %v657, %v656
    %v670 = vpack.c.b16 %v659, %v658
    %v671 = vpack.c.b16 %v661, %v660
    %v672 = vpack.c.b16 %v663, %v662
    %v673 = vpack.c.b16 %v665, %v664
    %682 = vmatprep.subr.bf16.mxu0 0
    %683 = vmatpush1.bf16.msra.mxu0 %v666
    %684 = vmatprep.subr.bf16.mxu0 0
    %685 = vmatpush1.bf16.msra.mxu0 %v667
    %686 = vmatprep.subr.bf16.mxu0 0
    %687 = vmatpush1.bf16.msra.mxu0 %v668
    %688 = vmatprep.subr.bf16.mxu0 0
    %689 = vmatpush1.bf16.msra.mxu0 %v669
    %690 = vmatprep.subr.bf16.mxu0 0
    %691 = vmatpush1.bf16.msra.mxu0 %v670
    %692 = vmatprep.subr.bf16.mxu0 0
    %693 = vmatpush1.bf16.msra.mxu0 %v671
    %694 = vmatprep.subr.bf16.mxu0 0
    %695 = vmatpush1.bf16.msra.mxu0 %v672
    %696 = vmatprep.subr.bf16.mxu0 0
    %697 = vmatpush1.bf16.msra.mxu0 %v673
    %698 = vmatprep.subr.bf16.mxu0 0
    %699 = vmatpush1.bf16.msra.mxu0 0
    %700 = vmatprep.subr.bf16.mxu0 0
    %701 = vmatpush1.bf16.msra.mxu0 0
    %702 = vmatprep.subr.bf16.mxu0 0
    %703 = vmatpush1.bf16.msra.mxu0 0
    %704 = vmatprep.subr.bf16.mxu0 0
    %705 = vmatpush1.bf16.msra.mxu0 0
    %706 = vmatprep.subr.bf16.mxu0 0
    %707 = vmatpush1.bf16.msra.mxu0 0
    %708 = vmatprep.subr.bf16.mxu0 0
    %709 = vmatpush1.bf16.msra.mxu0 0
    %710 = vmatprep.subr.bf16.mxu0 0
    %711 = vmatpush1.bf16.msra.mxu0 0
    %712 = vmatprep.subr.bf16.mxu0 0
    %713 = vmatpush1.bf16.msra.mxu0 0
    %714 = vmatprep.mubr.bf16.mxu0 0
    %715 = vmatmul.mubr.bf16.gmra.mrb[0].mxu0 %v607
    %v716 = vpop.f32.mrb[0].mxu0
    %v717 = vadd.f32 %v632, %v716
    %v718 = vpop.f32.mrb[0].mxu0
    %v719 = vpop.f32.mrb[0].mxu0
    %v720 = vadd.f32 %v632, %v719
    %v721 = vpop.f32.mrb[0].mxu0
    %722 = vmatprep.mubr.bf16.mxu0 0
    %723 = vmatmul.mubr.bf16.gmra.mrb[0].mxu0 %v608
    %v724 = vpop.f32.mrb[0].mxu0
    %v725 = vadd.f32 %v632, %v724
    %v726 = vpop.f32.mrb[0].mxu0
    %v727 = vpop.f32.mrb[0].mxu0
    %v728 = vadd.f32 %v632, %v727
    %v729 = vpop.f32.mrb[0].mxu0
    %730 = vmatprep.mubr.bf16.mxu0 0
    %731 = vmatmul.mubr.bf16.gmra.mrb[0].mxu0 %v609
    %v732 = vpop.f32.mrb[0].mxu0
    %v733 = vadd.f32 %v632, %v732
    %v734 = vpop.f32.mrb[0].mxu0
    %v735 = vpop.f32.mrb[0].mxu0
    %v736 = vadd.f32 %v632, %v735
    %v737 = vpop.f32.mrb[0].mxu0
    %738 = vmatprep.mubr.bf16.mxu0 0
    %739 = vmatmul.mubr.bf16.gmra.mrb[0].mxu0 %v610
    %v740 = vpop.f32.mrb[0].mxu0
    %v741 = vadd.f32 %v632, %v740
    %v742 = vpop.f32.mrb[0].mxu0
    %v743 = vpop.f32.mrb[0].mxu0
    %v744 = vadd.f32 %v632, %v743
    %v745 = vpop.f32.mrb[0].mxu0
    %746 = vdwg.mxu0
    %vm747 = vcmp.lt.s32.totalorder %v36, 9
    %v748 = vsel %vm747, %v717, -1e+30
    %v749 = vsel %vm747, %v720, -1e+30
    %v750 = vsel %vm747, %v725, -1e+30
    %v751 = vsel %vm747, %v728, -1e+30
    %v752 = vsel %vm747, %v733, -1e+30
    %v753 = vsel %vm747, %v736, -1e+30
    %v754 = vsel %vm747, %v741, -1e+30
    %v755 = vsel %vm747, %v744, -1e+30
    %756 = vmax.xlane.f32.xlu0 %v748
    %v757 = vpop.xlane.xlu0 %756
    %758 = vmax.xlane.f32.xlu0 %v749
    %v759 = vpop.xlane.xlu0 %758
    %760 = vmax.xlane.f32.xlu0 %v750
    %v761 = vpop.xlane.xlu0 %760
    %762 = vmax.xlane.f32.xlu0 %v751
    %v763 = vpop.xlane.xlu0 %762
    %764 = vmax.xlane.f32.xlu0 %v752
    %v765 = vpop.xlane.xlu0 %764
    %766 = vmax.xlane.f32.xlu0 %v753
    %v767 = vpop.xlane.xlu0 %766
    %768 = vmax.xlane.f32.xlu0 %v754
    %v769 = vpop.xlane.xlu0 %768
    %770 = vmax.xlane.f32.xlu0 %v755
    %v771 = vpop.xlane.xlu0 %770
    %v772 = vsub.f32 %v748, %v757
    %v773 = vsub.f32 %v749, %v759
    %v774 = vsub.f32 %v750, %v761
    %v775 = vsub.f32 %v751, %v763
    %v776 = vsub.f32 %v752, %v765
    %v777 = vsub.f32 %v753, %v767
    %v778 = vsub.f32 %v754, %v769
    %v779 = vsub.f32 %v755, %v771
    %v780 = vmul.f32 %v772, 1.442695
    %v781 = vpow.pop %v780
    %v782 = vmul.f32 %v773, 1.442695
    %v783 = vpow.pop %v782
    %v784 = vmul.f32 %v774, 1.442695
    %v785 = vpow.pop %v784
    %v786 = vmul.f32 %v775, 1.442695
    %v787 = vpow.pop %v786
    %v788 = vmul.f32 %v776, 1.442695
    %v789 = vpow.pop %v788
    %v790 = vmul.f32 %v777, 1.442695
    %v791 = vpow.pop %v790
    %v792 = vmul.f32 %v778, 1.442695
    %v793 = vpow.pop %v792
    %v794 = vmul.f32 %v779, 1.442695
    %v795 = vpow.pop %v794
    %796 = vadd.xlane.f32.xlu0 %v781
    %v797 = vpop.xlane.xlu0 %796
    %798 = vadd.xlane.f32.xlu0 %v783
    %v799 = vpop.xlane.xlu0 %798
    %800 = vadd.xlane.f32.xlu0 %v785
    %v801 = vpop.xlane.xlu0 %800
    %802 = vadd.xlane.f32.xlu0 %v787
    %v803 = vpop.xlane.xlu0 %802
    %804 = vadd.xlane.f32.xlu0 %v789
    %v805 = vpop.xlane.xlu0 %804
    %806 = vadd.xlane.f32.xlu0 %v791
    %v807 = vpop.xlane.xlu0 %806
    %808 = vadd.xlane.f32.xlu0 %v793
    %v809 = vpop.xlane.xlu0 %808
    %810 = vadd.xlane.f32.xlu0 %v795
    %v811 = vpop.xlane.xlu0 %810
    %v812 = vlog2.pop %v797
    %v813 = vmul.f32 %v812, 0.6931472
    %v814 = vlog2.pop %v799
    %v815 = vmul.f32 %v814, 0.6931472
    %v816 = vlog2.pop %v801
    %v817 = vmul.f32 %v816, 0.6931472
    %v818 = vlog2.pop %v803
    %v819 = vmul.f32 %v818, 0.6931472
    %v820 = vlog2.pop %v805
    %v821 = vmul.f32 %v820, 0.6931472
    %v822 = vlog2.pop %v807
    %v823 = vmul.f32 %v822, 0.6931472
    %v824 = vlog2.pop %v809
    %v825 = vmul.f32 %v824, 0.6931472
    %v826 = vlog2.pop %v811
    %v827 = vmul.f32 %v826, 0.6931472
    %v828 = vadd.f32 %v757, %v813
    %v829 = vadd.f32 %v759, %v815
    %v830 = vadd.f32 %v761, %v817
    %v831 = vadd.f32 %v763, %v819
    %v832 = vadd.f32 %v765, %v821
    %v833 = vadd.f32 %v767, %v823
    %v834 = vadd.f32 %v769, %v825
    %v835 = vadd.f32 %v771, %v827
    %836 = vset.pattern.permute.xlu0 1
    %837 = vperm.xlu0 %836, %v27
    %v838 = vpop.permute.xlu0 %837
    %839 = vset.pattern.permute.xlu0 1
    %840 = vperm.xlu0 %839, %v28
    %v841 = vpop.permute.xlu0 %840
    %842 = vset.pattern.permute.xlu0 1
    %843 = vperm.xlu0 %842, %v29
    %v844 = vpop.permute.xlu0 %843
    %845 = vset.pattern.permute.xlu0 1
    %846 = vperm.xlu0 %845, %v30
    %v847 = vpop.permute.xlu0 %846
    %848 = vset.pattern.permute.xlu0 1
    %849 = vperm.xlu0 %848, %v31
    %v850 = vpop.permute.xlu0 %849
    %851 = vset.pattern.permute.xlu0 1
    %852 = vperm.xlu0 %851, %v32
    %v853 = vpop.permute.xlu0 %852
    %854 = vset.pattern.permute.xlu0 1
    %855 = vperm.xlu0 %854, %v33
    %v856 = vpop.permute.xlu0 %855
    %857 = vset.pattern.permute.xlu0 1
    %858 = vperm.xlu0 %857, %v34
    %v859 = vpop.permute.xlu0 %858
    %vm860 = vcmp.eq.s32.totalorder %v36, %v838
    %vm861 = vcmp.eq.s32.totalorder %v36, %v841
    %vm862 = vcmp.eq.s32.totalorder %v36, %v844
    %vm863 = vcmp.eq.s32.totalorder %v36, %v847
    %vm864 = vcmp.eq.s32.totalorder %v36, %v850
    %vm865 = vcmp.eq.s32.totalorder %v36, %v853
    %vm866 = vcmp.eq.s32.totalorder %v36, %v856
    %vm867 = vcmp.eq.s32.totalorder %v36, %v859
    %v868 = vsel %vm860, %v748, 0.0
    %v869 = vsel %vm861, %v749, 0.0
    %v870 = vsel %vm862, %v750, 0.0
    %v871 = vsel %vm863, %v751, 0.0
    %v872 = vsel %vm864, %v752, 0.0
    %v873 = vsel %vm865, %v753, 0.0
    %v874 = vsel %vm866, %v754, 0.0
    %v875 = vsel %vm867, %v755, 0.0
    %876 = vadd.xlane.f32.xlu0 %v868
    %v877 = vpop.xlane.xlu0 %876
    %878 = vadd.xlane.f32.xlu0 %v869
    %v879 = vpop.xlane.xlu0 %878
    %880 = vadd.xlane.f32.xlu0 %v870
    %v881 = vpop.xlane.xlu0 %880
    %882 = vadd.xlane.f32.xlu0 %v871
    %v883 = vpop.xlane.xlu0 %882
    %884 = vadd.xlane.f32.xlu0 %v872
    %v885 = vpop.xlane.xlu0 %884
    %886 = vadd.xlane.f32.xlu0 %v873
    %v887 = vpop.xlane.xlu0 %886
    %888 = vadd.xlane.f32.xlu0 %v874
    %v889 = vpop.xlane.xlu0 %888
    %890 = vadd.xlane.f32.xlu0 %v875
    %v891 = vpop.xlane.xlu0 %890
    %v892 = vsub.f32 %v828, %v877
    %v893 = vsub.f32 %v829, %v879
    %v894 = vsub.f32 %v830, %v881
    %v895 = vsub.f32 %v831, %v883
    %v896 = vsub.f32 %v832, %v885
    %v897 = vsub.f32 %v833, %v887
    %v898 = vsub.f32 %v834, %v889
    %v899 = vsub.f32 %v835, %v891
    %v900 = vlaneseq
    %v901 = vshrl.u32 %v900, 7
    %v902 = vadd.s32 %v901, 8
    %v903 = vadd.s32 %v901, 16
    %v904 = vadd.s32 %v901, 24
    %v905 = vadd.s32 %v901, 32
    %v906 = vadd.s32 %v901, 40
    %v907 = vadd.s32 %v901, 48
    %v908 = vadd.s32 %v901, 56
    %vm909 = vcmp.ge.s32.totalorder %v901, 40
    %vm910 = vcmp.ge.s32.totalorder %v902, 40
    %vm911 = vcmp.ge.s32.totalorder %v903, 40
    %vm912 = vcmp.ge.s32.totalorder %v904, 40
    %vm913 = vcmp.ge.s32.totalorder %v905, 40
    %vm914 = vcmp.ge.s32.totalorder %v906, 40
    %vm915 = vcmp.ge.s32.totalorder %v907, 40
    %vm916 = vcmp.ge.s32.totalorder %v908, 40
    %v917 = vsel %vm909, 1, 0
    %v918 = vsel %vm910, 1, 0
    %v919 = vsel %vm911, 1, 0
    %v920 = vsel %vm912, 1, 0
    %v921 = vsel %vm913, 1, 0
    %v922 = vsel %vm914, 1, 0
    %v923 = vsel %vm915, 1, 0
    %v924 = vsel %vm916, 1, 0
    %v925 = vcvt.s32.f32 %v917
    %v926 = vcvt.s32.f32 %v918
    %v927 = vcvt.s32.f32 %v919
    %v928 = vcvt.s32.f32 %v920
    %v929 = vcvt.s32.f32 %v921
    %v930 = vcvt.s32.f32 %v922
    %v931 = vcvt.s32.f32 %v923
    %v932 = vcvt.s32.f32 %v924
    %vm933 = vcmp.eq.f32.partialorder %v748, %v757
    %vm934 = vcmp.eq.f32.partialorder %v749, %v759
    %vm935 = vcmp.eq.f32.partialorder %v750, %v761
    %vm936 = vcmp.eq.f32.partialorder %v751, %v763
    %vm937 = vcmp.eq.f32.partialorder %v752, %v765
    %vm938 = vcmp.eq.f32.partialorder %v753, %v767
    %vm939 = vcmp.eq.f32.partialorder %v754, %v769
    %vm940 = vcmp.eq.f32.partialorder %v755, %v771
    %v941 = vsel %vm933, %v36, 128
    %v942 = vsel %vm934, %v36, 128
    %v943 = vsel %vm935, %v36, 128
    %v944 = vsel %vm936, %v36, 128
    %v945 = vsel %vm937, %v36, 128
    %v946 = vsel %vm938, %v36, 128
    %v947 = vsel %vm939, %v36, 128
    %v948 = vsel %vm940, %v36, 128
    %v949 = vand.u32 %v941, 65535
    %v950 = vshra.s32 %v941, 16
    %v951 = vcvt.s32.f32 %v949
    %v952 = vcvt.s32.f32 %v950
    %953 = vmin.xlane.f32.xlu0 %v952
    %v954 = vpop.xlane.xlu0 %953
    %vm955 = vcmp.eq.f32.partialorder %v952, %v954
    %v956 = vsel %vm955, %v951, inf
    %957 = vmin.xlane.f32.xlu0 %v956
    %v958 = vpop.xlane.xlu0 %957
    %v959 = vcvt.f32.s32 %v958
    %v960 = vcvt.f32.s32 %v954
    %v961 = vshll.u32 %v960, 16
    %v962 = vadd.s32 %v961, %v959
    %v963 = vand.u32 %v942, 65535
    %v964 = vshra.s32 %v942, 16
    %v965 = vcvt.s32.f32 %v963
    %v966 = vcvt.s32.f32 %v964
    %967 = vmin.xlane.f32.xlu0 %v966
    %v968 = vpop.xlane.xlu0 %967
    %vm969 = vcmp.eq.f32.partialorder %v966, %v968
    %v970 = vsel %vm969, %v965, inf
    %971 = vmin.xlane.f32.xlu0 %v970
    %v972 = vpop.xlane.xlu0 %971
    %v973 = vcvt.f32.s32 %v972
    %v974 = vcvt.f32.s32 %v968
    %v975 = vshll.u32 %v974, 16
    %v976 = vadd.s32 %v975, %v973
    %v977 = vand.u32 %v943, 65535
    %v978 = vshra.s32 %v943, 16
    %v979 = vcvt.s32.f32 %v977
    %v980 = vcvt.s32.f32 %v978
    %981 = vmin.xlane.f32.xlu0 %v980
    %v982 = vpop.xlane.xlu0 %981
    %vm983 = vcmp.eq.f32.partialorder %v980, %v982
    %v984 = vsel %vm983, %v979, inf
    %985 = vmin.xlane.f32.xlu0 %v984
    %v986 = vpop.xlane.xlu0 %985
    %v987 = vcvt.f32.s32 %v986
    %v988 = vcvt.f32.s32 %v982
    %v989 = vshll.u32 %v988, 16
    %v990 = vadd.s32 %v989, %v987
    %v991 = vand.u32 %v944, 65535
    %v992 = vshra.s32 %v944, 16
    %v993 = vcvt.s32.f32 %v991
    %v994 = vcvt.s32.f32 %v992
    %995 = vmin.xlane.f32.xlu0 %v994
    %v996 = vpop.xlane.xlu0 %995
    %vm997 = vcmp.eq.f32.partialorder %v994, %v996
    %v998 = vsel %vm997, %v993, inf
    %999 = vmin.xlane.f32.xlu0 %v998
    %v1000 = vpop.xlane.xlu0 %999
    %v1001 = vcvt.f32.s32 %v1000
    %v1002 = vcvt.f32.s32 %v996
    %v1003 = vshll.u32 %v1002, 16
    %v1004 = vadd.s32 %v1003, %v1001
    %v1005 = vand.u32 %v945, 65535
    %v1006 = vshra.s32 %v945, 16
    %v1007 = vcvt.s32.f32 %v1005
    %v1008 = vcvt.s32.f32 %v1006
    %1009 = vmin.xlane.f32.xlu0 %v1008
    %v1010 = vpop.xlane.xlu0 %1009
    %vm1011 = vcmp.eq.f32.partialorder %v1008, %v1010
    %v1012 = vsel %vm1011, %v1007, inf
    %1013 = vmin.xlane.f32.xlu0 %v1012
    %v1014 = vpop.xlane.xlu0 %1013
    %v1015 = vcvt.f32.s32 %v1014
    %v1016 = vcvt.f32.s32 %v1010
    %v1017 = vshll.u32 %v1016, 16
    %v1018 = vadd.s32 %v1017, %v1015
    %v1019 = vand.u32 %v946, 65535
    %v1020 = vshra.s32 %v946, 16
    %v1021 = vcvt.s32.f32 %v1019
    %v1022 = vcvt.s32.f32 %v1020
    %1023 = vmin.xlane.f32.xlu0 %v1022
    %v1024 = vpop.xlane.xlu0 %1023
    %vm1025 = vcmp.eq.f32.partialorder %v1022, %v1024
    %v1026 = vsel %vm1025, %v1021, inf
    %1027 = vmin.xlane.f32.xlu0 %v1026
    %v1028 = vpop.xlane.xlu0 %1027
    %v1029 = vcvt.f32.s32 %v1028
    %v1030 = vcvt.f32.s32 %v1024
    %v1031 = vshll.u32 %v1030, 16
    %v1032 = vadd.s32 %v1031, %v1029
    %v1033 = vand.u32 %v947, 65535
    %v1034 = vshra.s32 %v947, 16
    %v1035 = vcvt.s32.f32 %v1033
    %v1036 = vcvt.s32.f32 %v1034
    %1037 = vmin.xlane.f32.xlu0 %v1036
    %v1038 = vpop.xlane.xlu0 %1037
    %vm1039 = vcmp.eq.f32.partialorder %v1036, %v1038
    %v1040 = vsel %vm1039, %v1035, inf
    %1041 = vmin.xlane.f32.xlu0 %v1040
    %v1042 = vpop.xlane.xlu0 %1041
    %v1043 = vcvt.f32.s32 %v1042
    %v1044 = vcvt.f32.s32 %v1038
    %v1045 = vshll.u32 %v1044, 16
    %v1046 = vadd.s32 %v1045, %v1043
    %v1047 = vand.u32 %v948, 65535
    %v1048 = vshra.s32 %v948, 16
    %v1049 = vcvt.s32.f32 %v1047
    %v1050 = vcvt.s32.f32 %v1048
    %1051 = vmin.xlane.f32.xlu0 %v1050
    %v1052 = vpop.xlane.xlu0 %1051
    %vm1053 = vcmp.eq.f32.partialorder %v1050, %v1052
    %v1054 = vsel %vm1053, %v1049, inf
    %1055 = vmin.xlane.f32.xlu0 %v1054
    %v1056 = vpop.xlane.xlu0 %1055
    %v1057 = vcvt.f32.s32 %v1056
    %v1058 = vcvt.f32.s32 %v1052
    %v1059 = vshll.u32 %v1058, 16
    %v1060 = vadd.s32 %v1059, %v1057
    %vm1061 = vcmp.eq.s32.totalorder %v962, %v27
    %vm1062 = vcmp.eq.s32.totalorder %v976, %v28
    %vm1063 = vcmp.eq.s32.totalorder %v990, %v29
    %vm1064 = vcmp.eq.s32.totalorder %v1004, %v30
    %vm1065 = vcmp.eq.s32.totalorder %v1018, %v31
    %vm1066 = vcmp.eq.s32.totalorder %v1032, %v32
    %vm1067 = vcmp.eq.s32.totalorder %v1046, %v33
    %vm1068 = vcmp.eq.s32.totalorder %v1060, %v34
    %v1069 = vsel %vm1061, 1, 0
    %v1070 = vsel %vm1062, 1, 0
    %v1071 = vsel %vm1063, 1, 0
    %v1072 = vsel %vm1064, 1, 0
    %v1073 = vsel %vm1065, 1, 0
    %v1074 = vsel %vm1066, 1, 0
    %v1075 = vsel %vm1067, 1, 0
    %v1076 = vsel %vm1068, 1, 0
    %v1077 = vcvt.s32.f32 %v1069
    %v1078 = vcvt.s32.f32 %v1070
    %v1079 = vcvt.s32.f32 %v1071
    %v1080 = vcvt.s32.f32 %v1072
    %v1081 = vcvt.s32.f32 %v1073
    %v1082 = vcvt.s32.f32 %v1074
    %v1083 = vcvt.s32.f32 %v1075
    %v1084 = vcvt.s32.f32 %v1076
    %v1085 = vadd.f32 %v892, %v893
    %v1086 = vadd.f32 %v1085, %v894
    %v1087 = vadd.f32 %v1086, %v895
    %v1088 = vadd.f32 %v1087, %v896
    %v1089 = vadd.f32 %v1088, %v897
    %v1090 = vadd.f32 %v1089, %v898
    %v1091 = vadd.f32 %v1090, %v899
    %v1092 = vrot.slane %v1091, 4
    %v1093 = vadd.f32 %v1091, %v1092
    %v1094 = vrot.slane %v1093, 2
    %v1095 = vadd.f32 %v1093, %v1094
    %v1096 = vrot.slane %v1095, 1
    %v1097 = vadd.f32 %v1095, %v1096
    %v1098 = vmul.f32 %v1097, 0.125
    %v1099 = vmul.f32 %v892, %v925
    %v1100 = vmul.f32 %v893, %v926
    %v1101 = vmul.f32 %v894, %v927
    %v1102 = vmul.f32 %v895, %v928
    %v1103 = vmul.f32 %v896, %v929
    %v1104 = vmul.f32 %v897, %v930
    %v1105 = vmul.f32 %v898, %v931
    %v1106 = vmul.f32 %v899, %v932
    %v1107 = vadd.f32 %v1099, %v1100
    %v1108 = vadd.f32 %v1107, %v1101
    %v1109 = vadd.f32 %v1108, %v1102
    %v1110 = vadd.f32 %v1109, %v1103
    %v1111 = vadd.f32 %v1110, %v1104
    %v1112 = vadd.f32 %v1111, %v1105
    %v1113 = vadd.f32 %v1112, %v1106
    %v1114 = vrot.slane %v1113, 4
    %v1115 = vadd.f32 %v1113, %v1114
    %v1116 = vrot.slane %v1115, 2
    %v1117 = vadd.f32 %v1115, %v1116
    %v1118 = vrot.slane %v1117, 1
    %v1119 = vadd.f32 %v1117, %v1118
    %v1120 = vmul.f32 %v1119, 0.125
    %v1121 = vmul.f32 %v1077, %v925
    %v1122 = vmul.f32 %v1078, %v926
    %v1123 = vmul.f32 %v1079, %v927
    %v1124 = vmul.f32 %v1080, %v928
    %v1125 = vmul.f32 %v1081, %v929
    %v1126 = vmul.f32 %v1082, %v930
    %v1127 = vmul.f32 %v1083, %v931
    %v1128 = vmul.f32 %v1084, %v932
    %vm1129 = vcmask 15368
    %v1130 = vsel %vm1129, %v1121, 0.0
    %v1131 = vsel %vm1129, %v1122, 0.0
    %v1132 = vadd.f32 %v1130, %v1131
    %v1133 = vsel %vm1129, %v1123, 0.0
    %v1134 = vadd.f32 %v1132, %v1133
    %v1135 = vsel %vm1129, %v1124, 0.0
    %v1136 = vadd.f32 %v1134, %v1135
    %v1137 = vsel %vm1129, %v1125, 0.0
    %v1138 = vadd.f32 %v1136, %v1137
    %v1139 = vsel %vm1129, %v1126, 0.0
    %v1140 = vadd.f32 %v1138, %v1139
    %v1141 = vsel %vm1129, %v1127, 0.0
    %v1142 = vadd.f32 %v1140, %v1141
    %v1143 = vsel %vm1129, %v1128, 0.0
    %v1144 = vadd.f32 %v1142, %v1143
    %v1145 = vrot.slane %v1144, 4
    %v1146 = vadd.f32 %v1144, %v1145
    %v1147 = vrot.slane %v1146, 2
    %v1148 = vadd.f32 %v1146, %v1147
    %v1149 = vrot.slane %v1148, 1
    %v1150 = vadd.f32 %v1148, %v1149
    %vm1151 = vcmp.eq.s32.totalorder %v36, 0
    %vm1152 = vcmp.eq.s32.totalorder %v36, 1
    %vm1153 = vcmp.eq.s32.totalorder %v36, 2
    %1155 = vset.pattern.permute.xlu0 1
    %1156 = vperm.xlu0 %1155, %v1150
    %v1157 = vpop.permute.xlu0 %1156
    %v1159 = vsel %vm1153, %v1157, 0.0
    %v1160 = vsel %vm1152, %v1120, %v1159
    %v1161 = vsel %vm1151, %v1098, %v1160
    %1162 = vst [vmem:[%s7] sm:$0x1] %v1161
    // Predicated region
    $region26: #{model_forward.1} parent=1 // pred_check
      _
    $region27: #{model_forward.1} parent=1 // pred_check_branch
      %1164 = sbr.rel (0) target = $region29
    $region28: #{model_forward.1} parent=1 // pred_region
      %s1166 = ssub.s32 1024, 1024
      %1167 = vsyncadd [#allocation3], %s1166
      %s1168 = sshll.u32 [#allocation2], 4
      %s1169 = int_to_ptr.vmem [resolvable:$true] %s1168
      %1174 = dma.vmem_to_hbm [thread:$0]  %s1169, 1024, %s6, [#allocation3], 128, 128, 8
    $region29: #{model_forward.1} parent=1 // pred_fallthru
      _
    // Predicated region
    $region30: #{model_forward.1} parent=1 // pred_check
      _
    $region31: #{model_forward.1} parent=1 // pred_check_branch
      %1176 = sbr.rel (0) target = $region33
    $region32: #{model_forward.1} parent=1 // pred_region
      _
    $region33: #{model_forward.1} parent=1 // pred_fallthru
      _
    // Predicated region
    $region34: #{model_forward.1} parent=1 // pred_check
      _
    $region35: #{model_forward.1} parent=1 // pred_check_branch
      %1178 = sbr.rel (0) target = $region37
    $region36: #{model_forward.1} parent=1 // pred_region
      %1179 = dma.done [#allocation3], 1024
    $region37: #{model_forward.1} parent=1 // pred_fallthru
      _
    // Predicated region
    $region38: #{model_forward.1} parent=1 // pred_check
      _
    $region39: #{model_forward.1} parent=1 // pred_check_branch
      %1181 = sbr.rel (0) target = $region41
    $region40: #{model_forward.1} parent=1 // pred_region
      _
    $region41: #{model_forward.1} parent=1 // pred_fallthru
      _
    %1182 = vsyncpa [#allocation3], 1

</llo_original>
